<compile_context>
chip_gen: v5e
topology: v5e:2x2
jax: 0.10.0
libtpu: 0.0.40
codegen_flags: <defaults>
</compile_context>

<pallas_src>
import functools

import jax
import jax.numpy as jnp
from jax import lax
from jax.experimental import pallas as pl
from jax.experimental.pallas import tpu as pltpu


def _online_supcon_step(j, dots, pos_f, valid, colv, out_ref,
                        m_sc, z_sc, smd_sc, sm_sc, *, neg_scale):
    """Flash-style update of the per-row-tile running statistics."""
    @pl.when(j == 0)
    def _():
        m_sc[...] = jnp.full_like(m_sc, -jnp.inf)
        z_sc[...] = jnp.zeros_like(z_sc)
        smd_sc[...] = jnp.zeros_like(smd_sc)
        sm_sc[...] = jnp.zeros_like(sm_sc)

    m_prev = m_sc[...]
    # Row max over real (non-padded) columns; the self-contrast diagonal is kept here to
    # mirror the reference's logits_max (the max cancels in the final log-prob anyway).
    tile_max = jnp.max(jnp.where(colv, dots, -jnp.inf), axis=1, keepdims=True)
    m_new = jnp.maximum(m_prev, tile_max)
    alpha = jnp.exp(m_prev - m_new)

    p = jnp.where(valid, jnp.exp(dots - m_new), 0.0)          # exp_logits * logits_mask
    z_sc[...] = alpha * z_sc[...] + jnp.sum(p, axis=1, keepdims=True)
    m_sc[...] = m_new
    smd_sc[...] = smd_sc[...] + jnp.sum(pos_f * dots, axis=1, keepdims=True)
    sm_sc[...] = sm_sc[...] + jnp.sum(pos_f, axis=1, keepdims=True)

    @pl.when(j == pl.num_programs(1) - 1)
    def _():
        # mean_log_prob_pos = sum(mask*dots)/sum(mask) - (max + log Z)
        # NOTE: rows with zero positives give NaN, matching the PyTorch reference.
        mlpp = smd_sc[...] / sm_sc[...] - (m_sc[...] + jnp.log(z_sc[...]))
        out_ref[...] = (neg_scale * mlpp).astype(out_ref.dtype)


def _validity(i, j, tm, tn, n_valid):
    row_ids = i * tm + lax.broadcasted_iota(jnp.int32, (tm, 1), 0)
    col_ids = j * tn + lax.broadcasted_iota(jnp.int32, (1, tn), 1)
    colv = col_ids < n_valid                              # [1,tn]: real (non-padded) cols
    valid = jnp.logical_and(row_ids != col_ids, colv)     # also drops self-contrast diag
    return colv, valid


def _supcon_labels_kernel(rowf_ref, colf_ref, rlab_ref, clab_ref, out_ref,
                          m_sc, z_sc, smd_sc, sm_sc, *, inv_temp, neg_scale, n_valid):
    i = pl.program_id(0)
    j = pl.program_id(1)
    tm = rowf_ref.shape[0]
    tn = colf_ref.shape[0]

    # Fold 1/temperature into the row operand (dtype-preserving: bf16 stays bf16 on MXU).
    rowf = rowf_ref[...] * inv_temp
    dots = lax.dot_general(rowf, colf_ref[...], (((1,), (1,)), ((), ())),
                           preferred_element_type=jnp.float32)        # [tm, tn]

    colv, valid = _validity(i, j, tm, tn, n_valid)
    pos = jnp.logical_and(rlab_ref[...] == clab_ref[...], valid)      # positive pairs
    pos_f = jnp.where(pos, 1.0, 0.0)

    _online_supcon_step(j, dots, pos_f, valid, colv, out_ref,
                        m_sc, z_sc, smd_sc, sm_sc, neg_scale=neg_scale)


def _supcon_mask_kernel(rowf_ref, colf_ref, mask_ref, out_ref,
                        m_sc, z_sc, smd_sc, sm_sc, *, inv_temp, neg_scale, n_valid):
    i = pl.program_id(0)
    j = pl.program_id(1)
    tm = rowf_ref.shape[0]
    tn = colf_ref.shape[0]

    rowf = rowf_ref[...] * inv_temp
    dots = lax.dot_general(rowf, colf_ref[...], (((1,), (1,)), ((), ())),
                           preferred_element_type=jnp.float32)

    colv, valid = _validity(i, j, tm, tn, n_valid)
    pos_f = jnp.where(valid, mask_ref[...].astype(jnp.float32), 0.0)

    _online_supcon_step(j, dots, pos_f, valid, colv, out_ref,
                        m_sc, z_sc, smd_sc, sm_sc, neg_scale=neg_scale)


def supcon_loss(features, labels=None, mask=None, *, temperature=0.07,
                contrast_mode="all", base_temperature=0.07, tile=128):
    """Pallas implementation of SupConLoss.forward (contrast_mode 'all' or 'one')."""
    if features.ndim < 3:
        raise ValueError("`features` needs to be [bsz, n_views, ...]")
    if labels is not None and mask is not None:
        raise ValueError("Cannot define both `labels` and `mask`")
    if contrast_mode not in ("all", "one"):
        raise ValueError("Unknown mode: {}".format(contrast_mode))

    b, v = features.shape[0], features.shape[1]
    features = features.reshape(b, v, -1)
    d = features.shape[-1]
    n = v * b

    t = int(tile)
    n_pad = -(-n // t) * t          # pad rows/cols to a tile multiple
    d_pad = -(-d // 128) * 128      # lane-align the contraction dim (zero padding is exact)

    # torch.cat(torch.unbind(features, dim=1), dim=0) -> view-major [N, D]
    cf = jnp.transpose(features, (1, 0, 2)).reshape(n, d)
    cf_pad = jnp.zeros((n_pad, d_pad), cf.dtype).at[:n, :d].set(cf)

    anchor_n = n if contrast_mode == "all" else b   # 'one': anchors are view-0 rows 0..B-1
    n_row_tiles = -(-anchor_n // t)
    n_col_tiles = n_pad // t
    grid = (n_row_tiles, n_col_tiles)

    inv_temp = 1.0 / float(temperature)
    neg_scale = -(float(temperature) / float(base_temperature))

    feat_row_spec = pl.BlockSpec((t, d_pad), lambda i, j: (i, 0))
    feat_col_spec = pl.BlockSpec((t, d_pad), lambda i, j: (j, 0))
    out_spec = pl.BlockSpec((t, 1), lambda i, j: (i, 0))
    out_shape = jax.ShapeDtypeStruct((n_row_tiles * t, 1), jnp.float32)
    scratch = [pltpu.VMEM((t, 1), jnp.float32) for _ in range(4)]
    cparams = pltpu.CompilerParams(
        dimension_semantics=("parallel", "arbitrary"))   # row tiles can shard across cores

    if mask is None:
        if labels is None:
            lab_b = jnp.arange(b, dtype=jnp.int32)       # SimCLR: eye(B) == distinct labels
        else:
            labels = jnp.asarray(labels).reshape(-1)
            if labels.shape[0] != b:
                raise ValueError("Num of labels does not match num of features")
            lab_b = labels.astype(jnp.int32)
        lab = jnp.full((n_pad,), -1, jnp.int32).at[:n].set(jnp.tile(lab_b, v))
        kernel = functools.partial(_supcon_labels_kernel, inv_temp=inv_temp,
                                   neg_scale=neg_scale, n_valid=n)
        out = pl.pallas_call(
            kernel,
            out_shape=out_shape,
            grid_spec=pltpu.PrefetchScalarGridSpec(
                num_scalar_prefetch=0,
                grid=grid,
                in_specs=[feat_row_spec, feat_col_spec,
                          pl.BlockSpec((t, 1), lambda i, j: (i, 0)),
                          pl.BlockSpec((1, t), lambda i, j: (0, j))],
                out_specs=out_spec,
                scratch_shapes=scratch),
            compiler_params=cparams,
        )(cf_pad, cf_pad, lab.reshape(n_pad, 1), lab.reshape(1, n_pad))
    else:
        # TODO(synk): an arbitrary (possibly asymmetric) [B,B] mask cannot be rebuilt from
        # labels in-kernel; it is tiled/padded once here and streamed tile-by-tile instead.
        base = jnp.asarray(mask, dtype=jnp.float32)
        mask_full = jnp.zeros((n_pad, n_pad), jnp.float32).at[:n, :n].set(
            jnp.tile(base, (v, v)))
        kernel = functools.partial(_supcon_mask_kernel, inv_temp=inv_temp,
                                   neg_scale=neg_scale, n_valid=n)
        out = pl.pallas_call(
            kernel,
            out_shape=out_shape,
            grid_spec=pltpu.PrefetchScalarGridSpec(
                num_scalar_prefetch=0,
                grid=grid,
                in_specs=[feat_row_spec, feat_col_spec,
                          pl.BlockSpec((t, t), lambda i, j: (i, j))],
                out_specs=out_spec,
                scratch_shapes=scratch),
            compiler_params=cparams,
        )(cf_pad, cf_pad, mask_full)

    # loss.view(anchor_count, batch_size).mean() == mean over all anchor rows.
    return jnp.mean(out[:anchor_n, 0])


def _supcon_reference(features, labels=None, mask=None, temperature=0.07,
                      contrast_mode="all", base_temperature=0.07):
    """Pure-JAX reference mirroring the PyTorch code."""
    b, v = features.shape[0], features.shape[1]
    features = features.reshape(b, v, -1)
    if labels is None and mask is None:
        mask = jnp.eye(b, dtype=jnp.float32)
    elif labels is not None:
        labels = jnp.asarray(labels).reshape(-1, 1)
        mask = (labels == labels.T).astype(jnp.float32)
    else:
        mask = jnp.asarray(mask, jnp.float32)
    cf = jnp.transpose(features, (1, 0, 2)).reshape(v * b, -1)
    if contrast_mode == "one":
        anchor_feature = features[:, 0]
        anchor_count = 1
    else:
        anchor_feature = cf
        anchor_count = v
    adc = jnp.dot(anchor_feature, cf.T) / temperature
    logits = adc - jnp.max(adc, axis=1, keepdims=True)
    mask = jnp.tile(mask, (anchor_count, v))
    na = anchor_count * b
    logits_mask = jnp.ones((na, v * b), jnp.float32).at[
        jnp.arange(na), jnp.arange(na)].set(0.0)
    mask = mask * logits_mask
    exp_logits = jnp.exp(logits) * logits_mask
    log_prob = logits - jnp.log(jnp.sum(exp_logits, axis=1, keepdims=True))
    mlpp = jnp.sum(mask * log_prob, axis=1) / jnp.sum(mask, axis=1)
    loss = -(temperature / base_temperature) * mlpp
    return jnp.mean(loss)


if __name__ == "__main__":
    key = jax.random.PRNGKey(0)
    k1, k2, k3, k4 = jax.random.split(key, 4)

    # Small single-tile case: batch=8, n_views=2, feature dim=32.
    B, V, D = 8, 2, 32
    feats = jax.random.normal(k1, (B, V, D), dtype=jnp.float32)
    feats = feats / jnp.linalg.norm(feats, axis=-1, keepdims=True)
    labels = jax.random.randint(k2, (B,), 0, 4)
    m = (labels.reshape(-1, 1) == labels.reshape(1, -1)).astype(jnp.float32)

    got = [
        supcon_loss(feats),                                        # SimCLR path
        supcon_loss(feats, labels=labels),                         # supervised (labels)
        supcon_loss(feats, mask=m),                                # explicit-mask path
        supcon_loss(feats, labels=labels, contrast_mode="one"),    # contrast_mode='one'
    ]
    want = [
        _supcon_reference(feats),
        _supcon_reference(feats, labels=labels),
        _supcon_reference(feats, mask=m),
        _supcon_reference(feats, labels=labels, contrast_mode="one"),
    ]

    # Multi-tile case (2x2 grid): exercises the online column reduction + row/col padding.
    B2, V2, D2 = 96, 2, 40
    feats2 = jax.random.normal(k3, (B2, V2, D2), dtype=jnp.float32)
    feats2 = feats2 / jnp.linalg.norm(feats2, axis=-1, keepdims=True)
    labels2 = jax.random.randint(k4, (B2,), 0, 10)
    got.append(supcon_loss(feats2, labels=labels2))
    want.append(_supcon_reference(feats2, labels=labels2))

    got = jax.block_until_ready(jnp.stack(got))
    want = jax.block_until_ready(jnp.stack(want))
    assert bool(jnp.all(jnp.isfinite(got))), got
    assert jnp.allclose(got, want, rtol=1e-4, atol=1e-5), (got, want)

    # bf16 features go straight to the MXU (f32 accumulation); loose check vs f32 reference.
    loss_bf16 = supcon_loss(feats2.astype(jnp.bfloat16), labels=labels2)
    jax.block_until_ready(loss_bf16)
    assert jnp.allclose(loss_bf16, want[-1], rtol=0.1, atol=0.1), (loss_bf16, want[-1])

    print("KERNEL_OK")
</pallas_src>

<mosaic_0001>
module attributes {stable_mosaic.version = 11 : i64} {
  func.func @_supcon_labels_kernel(%arg0: i32, %arg1: i32, %arg2: memref<128x128xf32, #tpu.memory_space<vmem>>, %arg3: memref<128x128xf32, #tpu.memory_space<vmem>>, %arg4: memref<128x1xi32, #tpu.memory_space<vmem>>, %arg5: memref<1x128xi32, #tpu.memory_space<vmem>>, %arg6: memref<128x1xf32, #tpu.memory_space<vmem>>, %arg7: memref<128x1xf32, #tpu.memory_space<vmem>>, %arg8: memref<128x1xf32, #tpu.memory_space<vmem>>, %arg9: memref<128x1xf32, #tpu.memory_space<vmem>>, %arg10: memref<128x1xf32, #tpu.memory_space<vmem>>) attributes {dimension_semantics = [#tpu.dimension_semantics<parallel>, #tpu.dimension_semantics<arbitrary>], iteration_bounds = array<i64: 1, 1>, scalar_prefetch = 0 : i64, scratch_operands = 4 : i64, tpu.core_type = #tpu.core_type<tc>, window_params = [{transform_indices = @transform_0, window_bounds = array<i64: 128, 128>}, {transform_indices = @transform_1, window_bounds = array<i64: 128, 128>}, {transform_indices = @transform_2, window_bounds = array<i64: 128, 1>}, {transform_indices = @transform_3, window_bounds = array<i64: 1, 128>}, {transform_indices = @transform_4, window_bounds = array<i64: 128, 1>}]} {
    %c0 = arith.constant 0 : index
    %c0_0 = arith.constant 0 : index
    %0 = vector.load %arg2[%c0, %c0_0] : memref<128x128xf32, #tpu.memory_space<vmem>>, vector<128x128xf32>
    %cst = arith.constant 14.2857141 : f32
    %1 = vector.broadcast %cst : f32 to vector<128x128xf32>
    %2 = arith.mulf %0, %1 : vector<128x128xf32>
    %c0_1 = arith.constant 0 : index
    %c0_2 = arith.constant 0 : index
    %3 = vector.load %arg3[%c0_1, %c0_2] : memref<128x128xf32, #tpu.memory_space<vmem>>, vector<128x128xf32>
    %cst_3 = arith.constant dense<0.000000e+00> : vector<128x128xf32>
    %4 = tpu.matmul %2, %3, %cst_3 {dimension_numbers = #tpu.dot_dimension_numbers<[1], [1], [0], [0], [0, 0, 1, 0], [], []>} : vector<128x128xf32>, vector<128x128xf32>, vector<128x128xf32> -> vector<128x128xf32>
    %c128_i32 = arith.constant 128 : i32
    %5 = arith.muli %arg0, %c128_i32 : i32
    %6 = tpu.iota {dimensions = array<i32: 0>} : vector<128x1xi32>
    %7 = vector.broadcast %5 : i32 to vector<128x1xi32>
    %8 = arith.addi %7, %6 : vector<128x1xi32>
    %c128_i32_4 = arith.constant 128 : i32
    %9 = arith.muli %arg1, %c128_i32_4 : i32
    %10 = tpu.iota {dimensions = array<i32: 1>} : vector<1x128xi32>
    %11 = vector.broadcast %9 : i32 to vector<1x128xi32>
    %12 = arith.addi %11, %10 : vector<1x128xi32>
    %c16_i32 = arith.constant 16 : i32
    %13 = vector.broadcast %c16_i32 : i32 to vector<1x128xi32>
    %14 = arith.cmpi slt, %12, %13 : vector<1x128xi32>
    %15 = vector.broadcast %8 : vector<128x1xi32> to vector<128x128xi32>
    %16 = vector.broadcast %12 : vector<1x128xi32> to vector<128x128xi32>
    %17 = arith.cmpi ne, %15, %16 : vector<128x128xi32>
    %18 = vector.broadcast %14 : vector<1x128xi1> to vector<128x128xi1>
    %19 = arith.andi %17, %18 : vector<128x128xi1>
    %c0_5 = arith.constant 0 : index
    %c0_6 = arith.constant 0 : index
    %20 = vector.load %arg4[%c0_5, %c0_6] : memref<128x1xi32, #tpu.memory_space<vmem>>, vector<128x1xi32>
    %c0_7 = arith.constant 0 : index
    %c0_8 = arith.constant 0 : index
    %21 = vector.load %arg5[%c0_7, %c0_8] : memref<1x128xi32, #tpu.memory_space<vmem>>, vector<1x128xi32>
    %22 = vector.broadcast %20 : vector<128x1xi32> to vector<128x128xi32>
    %23 = vector.broadcast %21 : vector<1x128xi32> to vector<128x128xi32>
    %24 = arith.cmpi eq, %22, %23 : vector<128x128xi32>
    %25 = arith.andi %24, %19 : vector<128x128xi1>
    %cst_9 = arith.constant 1.000000e+00 : f32
    %cst_10 = arith.constant 0.000000e+00 : f32
    %26 = vector.broadcast %cst_9 : f32 to vector<128x128xf32>
    %27 = vector.broadcast %cst_10 : f32 to vector<128x128xf32>
    %28 = arith.select %25, %26, %27 : vector<128x128xi1>, vector<128x128xf32>
    %c0_i32 = arith.constant 0 : i32
    %29 = arith.cmpi eq, %arg1, %c0_i32 : i32
    %30 = arith.extui %29 : i1 to i32
    %c0_i32_11 = arith.constant 0 : i32
    %31 = arith.cmpi ne, %30, %c0_i32_11 : i32
    scf.if %31 {
      %cst_36 = arith.constant 0xFF800000 : f32
      %68 = vector.broadcast %cst_36 : f32 to vector<128x1xf32>
      %c0_37 = arith.constant 0 : index
      %c0_38 = arith.constant 0 : index
      %69 = vector.load %arg7[%c0_37, %c0_38] : memref<128x1xf32, #tpu.memory_space<vmem>>, vector<128x1xf32>
      tpu.vector_store %arg7[%c0_37, %c0_38], %68 {strides = array<i32>} : memref<128x1xf32, #tpu.memory_space<vmem>>, vector<128x1xf32>,
      %cst_39 = arith.constant 0.000000e+00 : f32
      %70 = vector.broadcast %cst_39 : f32 to vector<128x1xf32>
      %c0_40 = arith.constant 0 : index
      %c0_41 = arith.constant 0 : index
      %71 = vector.load %arg8[%c0_40, %c0_41] : memref<128x1xf32, #tpu.memory_space<vmem>>, vector<128x1xf32>
      tpu.vector_store %arg8[%c0_40, %c0_41], %70 {strides = array<i32>} : memref<128x1xf32, #tpu.memory_space<vmem>>, vector<128x1xf32>,
      %cst_42 = arith.constant 0.000000e+00 : f32
      %72 = vector.broadcast %cst_42 : f32 to vector<128x1xf32>
      %c0_43 = arith.constant 0 : index
      %c0_44 = arith.constant 0 : index
      %73 = vector.load %arg9[%c0_43, %c0_44] : memref<128x1xf32, #tpu.memory_space<vmem>>, vector<128x1xf32>
      tpu.vector_store %arg9[%c0_43, %c0_44], %72 {strides = array<i32>} : memref<128x1xf32, #tpu.memory_space<vmem>>, vector<128x1xf32>,
      %cst_45 = arith.constant 0.000000e+00 : f32
      %74 = vector.broadcast %cst_45 : f32 to vector<128x1xf32>
      %c0_46 = arith.constant 0 : index
      %c0_47 = arith.constant 0 : index
      %75 = vector.load %arg10[%c0_46, %c0_47] : memref<128x1xf32, #tpu.memory_space<vmem>>, vector<128x1xf32>
      tpu.vector_store %arg10[%c0_46, %c0_47], %74 {strides = array<i32>} : memref<128x1xf32, #tpu.memory_space<vmem>>, vector<128x1xf32>,
    } else {
    }
    %c0_12 = arith.constant 0 : index
    %c0_13 = arith.constant 0 : index
    %32 = vector.load %arg7[%c0_12, %c0_13] : memref<128x1xf32, #tpu.memory_space<vmem>>, vector<128x1xf32>
    %cst_14 = arith.constant 0xFF800000 : f32
    %33 = vector.shape_cast %14 : vector<1x128xi1> to vector<1x128xi1>
    %34 = vector.broadcast %33 : vector<1x128xi1> to vector<128x128xi1>
    %35 = vector.broadcast %cst_14 : f32 to vector<128x128xf32>
    %36 = arith.select %34, %4, %35 : vector<128x128xi1>, vector<128x128xf32>
    %cst_15 = arith.constant dense<0xFF800000> : vector<128xf32>
    %37 = vector.multi_reduction <maximumf>, %36, %cst_15 [1] : vector<128x128xf32> to vector<128xf32>
    %38 = vector.shape_cast %37 : vector<128xf32> to vector<128x1xf32>
    %39 = arith.maximumf %32, %38 : vector<128x1xf32>
    %40 = arith.subf %32, %39 : vector<128x1xf32>
    %41 = math.exp %40 : vector<128x1xf32>
    %42 = vector.broadcast %39 : vector<128x1xf32> to vector<128x128xf32>
    %43 = arith.subf %4, %42 : vector<128x128xf32>
    %44 = math.exp %43 : vector<128x128xf32>
    %cst_16 = arith.constant 0.000000e+00 : f32
    %45 = vector.broadcast %cst_16 : f32 to vector<128x128xf32>
    %46 = arith.select %19, %44, %45 : vector<128x128xi1>, vector<128x128xf32>
    %c0_17 = arith.constant 0 : index
    %c0_18 = arith.constant 0 : index
    %47 = vector.load %arg8[%c0_17, %c0_18] : memref<128x1xf32, #tpu.memory_space<vmem>>, vector<128x1xf32>
    %48 = arith.mulf %41, %47 : vector<128x1xf32>
    %cst_19 = arith.constant dense<0.000000e+00> : vector<128xf32>
    %49 = vector.multi_reduction <add>, %46, %cst_19 [1] : vector<128x128xf32> to vector<128xf32>
    %50 = vector.shape_cast %49 : vector<128xf32> to vector<128x1xf32>
    %51 = arith.addf %48, %50 : vector<128x1xf32>
    %c0_20 = arith.constant 0 : index
    %c0_21 = arith.constant 0 : index
    %52 = vector.load %arg8[%c0_20, %c0_21] : memref<128x1xf32, #tpu.memory_space<vmem>>, vector<128x1xf32>
    tpu.vector_store %arg8[%c0_20, %c0_21], %51 {strides = array<i32>} : memref<128x1xf32, #tpu.memory_space<vmem>>, vector<128x1xf32>,
    %c0_22 = arith.constant 0 : index
    %c0_23 = arith.constant 0 : index
    %53 = vector.load %arg7[%c0_22, %c0_23] : memref<128x1xf32, #tpu.memory_space<vmem>>, vector<128x1xf32>
    tpu.vector_store %arg7[%c0_22, %c0_23], %39 {strides = array<i32>} : memref<128x1xf32, #tpu.memory_space<vmem>>, vector<128x1xf32>,
    %c0_24 = arith.constant 0 : index
    %c0_25 = arith.constant 0 : index
    %54 = vector.load %arg9[%c0_24, %c0_25] : memref<128x1xf32, #tpu.memory_space<vmem>>, vector<128x1xf32>
    %55 = arith.mulf %28, %4 : vector<128x128xf32>
    %cst_26 = arith.constant dense<0.000000e+00> : vector<128xf32>
    %56 = vector.multi_reduction <add>, %55, %cst_26 [1] : vector<128x128xf32> to vector<128xf32>
    %57 = vector.shape_cast %56 : vector<128xf32> to vector<128x1xf32>
    %58 = arith.addf %54, %57 : vector<128x1xf32>
    %c0_27 = arith.constant 0 : index
    %c0_28 = arith.constant 0 : index
    %59 = vector.load %arg9[%c0_27, %c0_28] : memref<128x1xf32, #tpu.memory_space<vmem>>, vector<128x1xf32>
    tpu.vector_store %arg9[%c0_27, %c0_28], %58 {strides = array<i32>} : memref<128x1xf32, #tpu.memory_space<vmem>>, vector<128x1xf32>,
    %c0_29 = arith.constant 0 : index
    %c0_30 = arith.constant 0 : index
    %60 = vector.load %arg10[%c0_29, %c0_30] : memref<128x1xf32, #tpu.memory_space<vmem>>, vector<128x1xf32>
    %cst_31 = arith.constant dense<0.000000e+00> : vector<128xf32>
    %61 = vector.multi_reduction <add>, %28, %cst_31 [1] : vector<128x128xf32> to vector<128xf32>
    %62 = vector.shape_cast %61 : vector<128xf32> to vector<128x1xf32>
    %63 = arith.addf %60, %62 : vector<128x1xf32>
    %c0_32 = arith.constant 0 : index
    %c0_33 = arith.constant 0 : index
    %64 = vector.load %arg10[%c0_32, %c0_33] : memref<128x1xf32, #tpu.memory_space<vmem>>, vector<128x1xf32>
    tpu.vector_store %arg10[%c0_32, %c0_33], %63 {strides = array<i32>} : memref<128x1xf32, #tpu.memory_space<vmem>>, vector<128x1xf32>,
    %c0_i32_34 = arith.constant 0 : i32
    %65 = arith.cmpi eq, %arg1, %c0_i32_34 : i32
    %66 = arith.extui %65 : i1 to i32
    %c0_i32_35 = arith.constant 0 : i32
    %67 = arith.cmpi ne, %66, %c0_i32_35 : i32
    scf.if %67 {
      %c0_36 = arith.constant 0 : index
      %c0_37 = arith.constant 0 : index
      %68 = vector.load %arg9[%c0_36, %c0_37] : memref<128x1xf32, #tpu.memory_space<vmem>>, vector<128x1xf32>
      %c0_38 = arith.constant 0 : index
      %c0_39 = arith.constant 0 : index
      %69 = vector.load %arg10[%c0_38, %c0_39] : memref<128x1xf32, #tpu.memory_space<vmem>>, vector<128x1xf32>
      %70 = arith.divf %68, %69 : vector<128x1xf32>
      %c0_40 = arith.constant 0 : index
      %c0_41 = arith.constant 0 : index
      %71 = vector.load %arg7[%c0_40, %c0_41] : memref<128x1xf32, #tpu.memory_space<vmem>>, vector<128x1xf32>
      %c0_42 = arith.constant 0 : index
      %c0_43 = arith.constant 0 : index
      %72 = vector.load %arg8[%c0_42, %c0_43] : memref<128x1xf32, #tpu.memory_space<vmem>>, vector<128x1xf32>
      %73 = math.log %72 : vector<128x1xf32>
      %74 = arith.addf %71, %73 : vector<128x1xf32>
      %75 = arith.subf %70, %74 : vector<128x1xf32>
      %cst_44 = arith.constant -1.000000e+00 : f32
      %76 = vector.broadcast %cst_44 : f32 to vector<128x1xf32>
      %77 = arith.mulf %76, %75 : vector<128x1xf32>
      %c0_45 = arith.constant 0 : index
      %c0_46 = arith.constant 0 : index
      %78 = vector.load %arg6[%c0_45, %c0_46] : memref<128x1xf32, #tpu.memory_space<vmem>>, vector<128x1xf32>
      tpu.vector_store %arg6[%c0_45, %c0_46], %77 {strides = array<i32>} : memref<128x1xf32, #tpu.memory_space<vmem>>, vector<128x1xf32>,
    } else {
    }
    return
  }
  func.func @transform_0(%arg0: i32, %arg1: i32) -> (i32, i32) {
    %c0_i32 = arith.constant 0 : i32
    %c0_i32_0 = arith.constant 0 : i32
    return %arg0, %c0_i32 : i32, i32
  }
  func.func @transform_1(%arg0: i32, %arg1: i32) -> (i32, i32) {
    %c0_i32 = arith.constant 0 : i32
    %c0_i32_0 = arith.constant 0 : i32
    return %arg1, %c0_i32 : i32, i32
  }
  func.func @transform_2(%arg0: i32, %arg1: i32) -> (i32, i32) {
    %c0_i32 = arith.constant 0 : i32
    %c0_i32_0 = arith.constant 0 : i32
    return %arg0, %c0_i32 : i32, i32
  }
  func.func @transform_3(%arg0: i32, %arg1: i32) -> (i32, i32) {
    %c0_i32 = arith.constant 0 : i32
    %c0_i32_0 = arith.constant 0 : i32
    return %c0_i32, %arg1 : i32, i32
  }
  func.func @transform_4(%arg0: i32, %arg1: i32) -> (i32, i32) {
    %c0_i32 = arith.constant 0 : i32
    %c0_i32_0 = arith.constant 0 : i32
    return %arg0, %c0_i32 : i32, i32
  }
}

</mosaic_0001>

<llo_original>
// kernel: tpu_custom_call.1
$region0: #{tpu_custom_call.1}
  #allocation0 [shape = 'u32[]', space=smem, size = 0x4, offset = 0x4, fixed_abs, tag = 'smem constant byte address 0x4 - core index']
  #allocation1 [shape = 'u32[72,128]{1,0:T(1,128)}', space=vmem, size = 0x9000, scoped, tag = 'internal scratch']
  #allocation2 [shape = 'f32[128,1]{1,0:T(8,128)}', space=vmem, size = 0x10000, scoped, tag = 'scratch operand']
  #allocation3 [shape = 'f32[128,1]{1,0:T(8,128)}', space=vmem, size = 0x10000, scoped, tag = 'scratch operand']
  #allocation4 [shape = 'f32[128,1]{1,0:T(8,128)}', space=vmem, size = 0x10000, scoped, tag = 'scratch operand']
  #allocation5 [shape = 'f32[128,1]{1,0:T(8,128)}', space=vmem, size = 0x10000, scoped, tag = 'scratch operand']
  %s0 = inlined_call_operand.vmem [shape: f32[128,128], index: 0, kind: input, shape index: {}]
  %s1 = inlined_call_operand.hbm [shape: f32[128,128], index: 1, kind: input, shape index: {}]
  %s2 = inlined_call_operand.vmem [shape: s32[128,1], index: 2, kind: input, shape index: {}]
  %s3 = inlined_call_operand.vmem [shape: s32[1,128], index: 3, kind: input, shape index: {}]
  %s4 = inlined_call_operand.vmem [shape: f32[128,1], index: 4, kind: output, shape index: {}]
  %s5 = sld [smem:[#allocation0]]
  $region38: #{tpu_custom_call.1} parent=0
    _
  %s7 = ssub.s32 1, %s5
  %s8 = scalar_select 0, %s7, %s5
  $region1: #{tpu_custom_call.1} parent=0
    #allocation6 [shape = 'u8[65536]{0}', space=vmem, size = 0x10000, scoped, tag = 'input window, operand 1, single buffered']
    #allocation7 [shape = 's32[1]{0}', space=sflag, size = 0x4, scoped, tag = 'scoped memory for tpu_custom_call.1']
    %9 = vsyncpa [#allocation7], 0
    // Predicated region
    $region2: #{tpu_custom_call.1} parent=1 // pred_check
      _
    $region3: #{tpu_custom_call.1} parent=1 // pred_check_branch
      %11 = sbr.rel (0) target = $region5
    $region4: #{tpu_custom_call.1} parent=1 // pred_region
      _
    $region5: #{tpu_custom_call.1} parent=1 // pred_fallthru
      _
    // Predicated region
    $region6: #{tpu_custom_call.1} parent=1 // pred_check
      _
    $region7: #{tpu_custom_call.1} parent=1 // pred_check_branch
      %13 = sbr.rel (0) target = $region9
    $region8: #{tpu_custom_call.1} parent=1 // pred_region
      %15 = vsyncadd [#allocation7], 0
      %s16 = sshll.u32 %s1, 4
      %s17 = int_to_ptr.hbm [resolvable:$true] %s16
      %s18 = sshll.u32 [#allocation6], 4
      %s19 = int_to_ptr.vmem [resolvable:$true] %s18
      %24 = dma.hbm_to_vmem [thread:$0]  %s17, 2048, %s19, [#allocation7], 128, 128, 8
    $region9: #{tpu_custom_call.1} parent=1 // pred_fallthru
      _
    // Predicated region
    $region10: #{tpu_custom_call.1} parent=1 // pred_check
      _
    $region11: #{tpu_custom_call.1} parent=1 // pred_check_branch
      %26 = sbr.rel (0) target = $region13
    $region12: #{tpu_custom_call.1} parent=1 // pred_region
      _
    $region13: #{tpu_custom_call.1} parent=1 // pred_fallthru
      _
    // Predicated region
    $region14: #{tpu_custom_call.1} parent=1 // pred_check
      _
    $region15: #{tpu_custom_call.1} parent=1 // pred_check_branch
      %28 = sbr.rel (0) target = $region17
    $region16: #{tpu_custom_call.1} parent=1 // pred_region
      _
    $region17: #{tpu_custom_call.1} parent=1 // pred_fallthru
      _
    // Predicated region
    $region18: #{tpu_custom_call.1} parent=1 // pred_check
      _
    $region19: #{tpu_custom_call.1} parent=1 // pred_check_branch
      %30 = sbr.rel (0) target = $region21
    $region20: #{tpu_custom_call.1} parent=1 // pred_region
      %32 = dma.done [#allocation7], 2048
    $region21: #{tpu_custom_call.1} parent=1 // pred_fallthru
      _
    %v33 = vld [vmem:[%s0] sm:$0xff]
    %v34 = vld [vmem:[%s0 + $0x8] sm:$0xff]
    %v35 = vld [vmem:[%s0 + $0x10] sm:$0xff]
    %v36 = vld [vmem:[%s0 + $0x18] sm:$0xff]
    %v37 = vld [vmem:[%s0 + $0x20] sm:$0xff]
    %v38 = vld [vmem:[%s0 + $0x28] sm:$0xff]
    %v39 = vld [vmem:[%s0 + $0x30] sm:$0xff]
    %v40 = vld [vmem:[%s0 + $0x38] sm:$0xff]
    %v41 = vld [vmem:[%s0 + $0x40] sm:$0xff]
    %v42 = vld [vmem:[%s0 + $0x48] sm:$0xff]
    %v43 = vld [vmem:[%s0 + $0x50] sm:$0xff]
    %v44 = vld [vmem:[%s0 + $0x58] sm:$0xff]
    %v45 = vld [vmem:[%s0 + $0x60] sm:$0xff]
    %v46 = vld [vmem:[%s0 + $0x68] sm:$0xff]
    %v47 = vld [vmem:[%s0 + $0x70] sm:$0xff]
    %v48 = vld [vmem:[%s0 + $0x78] sm:$0xff]
    %v49 = vmul.f32 %v33, 14.285714
    %v50 = vmul.f32 %v34, 14.285714
    %v51 = vmul.f32 %v35, 14.285714
    %v52 = vmul.f32 %v36, 14.285714
    %v53 = vmul.f32 %v37, 14.285714
    %v54 = vmul.f32 %v38, 14.285714
    %v55 = vmul.f32 %v39, 14.285714
    %v56 = vmul.f32 %v40, 14.285714
    %v57 = vmul.f32 %v41, 14.285714
    %v58 = vmul.f32 %v42, 14.285714
    %v59 = vmul.f32 %v43, 14.285714
    %v60 = vmul.f32 %v44, 14.285714
    %v61 = vmul.f32 %v45, 14.285714
    %v62 = vmul.f32 %v46, 14.285714
    %v63 = vmul.f32 %v47, 14.285714
    %v64 = vmul.f32 %v48, 14.285714
    %v65 = vld [vmem:[#allocation6] sm:$0xff]
    %v66 = vld [vmem:[#allocation6 + $0x8] sm:$0xff]
    %v67 = vld [vmem:[#allocation6 + $0x10] sm:$0xff]
    %v68 = vld [vmem:[#allocation6 + $0x18] sm:$0xff]
    %v69 = vld [vmem:[#allocation6 + $0x20] sm:$0xff]
    %v70 = vld [vmem:[#allocation6 + $0x28] sm:$0xff]
    %v71 = vld [vmem:[#allocation6 + $0x30] sm:$0xff]
    %v72 = vld [vmem:[#allocation6 + $0x38] sm:$0xff]
    %v73 = vld [vmem:[#allocation6 + $0x40] sm:$0xff]
    %v74 = vld [vmem:[#allocation6 + $0x48] sm:$0xff]
    %v75 = vld [vmem:[#allocation6 + $0x50] sm:$0xff]
    %v76 = vld [vmem:[#allocation6 + $0x58] sm:$0xff]
    %v77 = vld [vmem:[#allocation6 + $0x60] sm:$0xff]
    %v78 = vld [vmem:[#allocation6 + $0x68] sm:$0xff]
    %v79 = vld [vmem:[#allocation6 + $0x70] sm:$0xff]
    %v80 = vld [vmem:[#allocation6 + $0x78] sm:$0xff]
    %81 = vmatpush.xpose.msra.mxu0 %v80
    %82 = vmatpush.xpose.msra.mxu0 %v79
    %83 = vmatpush.xpose.msra.mxu0 %v78
    %84 = vmatpush.xpose.msra.mxu0 %v77
    %85 = vmatpush.xpose.msra.mxu0 %v76
    %86 = vmatpush.xpose.msra.mxu0 %v75
    %87 = vmatpush.xpose.msra.mxu0 %v74
    %88 = vmatpush.xpose.msra.mxu0 %v73
    %89 = vmatpush.xpose.msra.mxu0 %v72
    %90 = vmatpush.xpose.msra.mxu0 %v71
    %91 = vmatpush.xpose.msra.mxu0 %v70
    %92 = vmatpush.xpose.msra.mxu0 %v69
    %93 = vmatpush.xpose.msra.mxu0 %v68
    %94 = vmatpush.xpose.msra.mxu0 %v67
    %95 = vmatpush.xpose.msra.mxu0 %v66
    %96 = vmatpush.xpose.msra.mxu0 %v65
    %97 = vmatmul.f32.gmra.mxu0 %v49
    %v98 = vpop.f32.mrf.mxu0
    %v99 = vadd.f32 0.0, %v98
    %100 = vmatmul.f32.gmra.mxu0 %v50
    %v101 = vpop.f32.mrf.mxu0
    %v102 = vadd.f32 0.0, %v101
    %103 = vmatmul.f32.gmra.mxu0 %v51
    %v104 = vpop.f32.mrf.mxu0
    %v105 = vadd.f32 0.0, %v104
    %106 = vmatmul.f32.gmra.mxu0 %v52
    %v107 = vpop.f32.mrf.mxu0
    %v108 = vadd.f32 0.0, %v107
    %109 = vmatmul.f32.gmra.mxu0 %v53
    %v110 = vpop.f32.mrf.mxu0
    %v111 = vadd.f32 0.0, %v110
    %112 = vmatmul.f32.gmra.mxu0 %v54
    %v113 = vpop.f32.mrf.mxu0
    %v114 = vadd.f32 0.0, %v113
    %115 = vmatmul.f32.gmra.mxu0 %v55
    %v116 = vpop.f32.mrf.mxu0
    %v117 = vadd.f32 0.0, %v116
    %118 = vmatmul.f32.gmra.mxu0 %v56
    %v119 = vpop.f32.mrf.mxu0
    %v120 = vadd.f32 0.0, %v119
    %121 = vmatmul.f32.gmra.mxu0 %v57
    %v122 = vpop.f32.mrf.mxu0
    %v123 = vadd.f32 0.0, %v122
    %124 = vmatmul.f32.gmra.mxu0 %v58
    %v125 = vpop.f32.mrf.mxu0
    %v126 = vadd.f32 0.0, %v125
    %127 = vmatmul.f32.gmra.mxu0 %v59
    %v128 = vpop.f32.mrf.mxu0
    %v129 = vadd.f32 0.0, %v128
    %130 = vmatmul.f32.gmra.mxu0 %v60
    %v131 = vpop.f32.mrf.mxu0
    %v132 = vadd.f32 0.0, %v131
    %133 = vmatmul.f32.gmra.mxu0 %v61
    %v134 = vpop.f32.mrf.mxu0
    %v135 = vadd.f32 0.0, %v134
    %136 = vmatmul.f32.gmra.mxu0 %v62
    %v137 = vpop.f32.mrf.mxu0
    %v138 = vadd.f32 0.0, %v137
    %139 = vmatmul.f32.gmra.mxu0 %v63
    %v140 = vpop.f32.mrf.mxu0
    %v141 = vadd.f32 0.0, %v140
    %142 = vmatmul.f32.gmra.mxu0 %v64
    %v143 = vpop.f32.mrf.mxu0
    %v144 = vadd.f32 0.0, %v143
    %145 = vdwg.mxu0
    %s146 = smul.u32 0, 128
    %v147 = vlaneseq
    %v148 = vshrl.u32 %v147, 7
    %v149 = vadd.s32 %v148, 8
    %v150 = vadd.s32 %v148, 16
    %v151 = vadd.s32 %v148, 24
    %v152 = vadd.s32 %v148, 32
    %v153 = vadd.s32 %v148, 40
    %v154 = vadd.s32 %v148, 48
    %v155 = vadd.s32 %v148, 56
    %v156 = vadd.s32 %v148, 64
    %v157 = vadd.s32 %v148, 72
    %v158 = vadd.s32 %v148, 80
    %v159 = vadd.s32 %v148, 88
    %v160 = vadd.s32 %v148, 96
    %v161 = vadd.s32 %v148, 104
    %v162 = vadd.s32 %v148, 112
    %v163 = vadd.s32 %v148, 120
    %v164 = vstv %s146
    %v165 = vadd.s32 %v164, %v148
    %v166 = vadd.s32 %v164, %v149
    %v167 = vadd.s32 %v164, %v150
    %v168 = vadd.s32 %v164, %v151
    %v169 = vadd.s32 %v164, %v152
    %v170 = vadd.s32 %v164, %v153
    %v171 = vadd.s32 %v164, %v154
    %v172 = vadd.s32 %v164, %v155
    %v173 = vadd.s32 %v164, %v156
    %v174 = vadd.s32 %v164, %v157
    %v175 = vadd.s32 %v164, %v158
    %v176 = vadd.s32 %v164, %v159
    %v177 = vadd.s32 %v164, %v160
    %v178 = vadd.s32 %v164, %v161
    %v179 = vadd.s32 %v164, %v162
    %v180 = vadd.s32 %v164, %v163
    %s181 = smul.u32 0, 128
    %v182 = vlaneseq
    %v183 = vand.u32 %v182, 127
    %v184 = vstv %s181
    %v185 = vadd.s32 %v184, %v183
    %vm186 = vcmp.lt.s32.totalorder %v185, 16
    %vm187 = vcmp.ne.s32.totalorder %v165, %v185
    %vm188 = vcmp.ne.s32.totalorder %v166, %v185
    %vm189 = vcmp.ne.s32.totalorder %v167, %v185
    %vm190 = vcmp.ne.s32.totalorder %v168, %v185
    %vm191 = vcmp.ne.s32.totalorder %v169, %v185
    %vm192 = vcmp.ne.s32.totalorder %v170, %v185
    %vm193 = vcmp.ne.s32.totalorder %v171, %v185
    %vm194 = vcmp.ne.s32.totalorder %v172, %v185
    %vm195 = vcmp.ne.s32.totalorder %v173, %v185
    %vm196 = vcmp.ne.s32.totalorder %v174, %v185
    %vm197 = vcmp.ne.s32.totalorder %v175, %v185
    %vm198 = vcmp.ne.s32.totalorder %v176, %v185
    %vm199 = vcmp.ne.s32.totalorder %v177, %v185
    %vm200 = vcmp.ne.s32.totalorder %v178, %v185
    %vm201 = vcmp.ne.s32.totalorder %v179, %v185
    %vm202 = vcmp.ne.s32.totalorder %v180, %v185
    %v203 = vsel %vm186, 1, 0
    %vm204 = vcmp.eq.s32.totalorder %v203, 1
    %vm205 = vmand %vm187, %vm204
    %vm206 = vmand %vm188, %vm204
    %vm207 = vmand %vm189, %vm204
    %vm208 = vmand %vm190, %vm204
    %vm209 = vmand %vm191, %vm204
    %vm210 = vmand %vm192, %vm204
    %vm211 = vmand %vm193, %vm204
    %vm212 = vmand %vm194, %vm204
    %vm213 = vmand %vm195, %vm204
    %vm214 = vmand %vm196, %vm204
    %vm215 = vmand %vm197, %vm204
    %vm216 = vmand %vm198, %vm204
    %vm217 = vmand %vm199, %vm204
    %vm218 = vmand %vm200, %vm204
    %vm219 = vmand %vm201, %vm204
    %vm220 = vmand %vm202, %vm204
    %v221 = vld [vmem:[%s2] sm:$0xff]
    %v222 = vld [vmem:[%s2 + $0x8] sm:$0xff]
    %v223 = vld [vmem:[%s2 + $0x10] sm:$0xff]
    %v224 = vld [vmem:[%s2 + $0x18] sm:$0xff]
    %v225 = vld [vmem:[%s2 + $0x20] sm:$0xff]
    %v226 = vld [vmem:[%s2 + $0x28] sm:$0xff]
    %v227 = vld [vmem:[%s2 + $0x30] sm:$0xff]
    %v228 = vld [vmem:[%s2 + $0x38] sm:$0xff]
    %v229 = vld [vmem:[%s2 + $0x40] sm:$0xff]
    %v230 = vld [vmem:[%s2 + $0x48] sm:$0xff]
    %v231 = vld [vmem:[%s2 + $0x50] sm:$0xff]
    %v232 = vld [vmem:[%s2 + $0x58] sm:$0xff]
    %v233 = vld [vmem:[%s2 + $0x60] sm:$0xff]
    %v234 = vld [vmem:[%s2 + $0x68] sm:$0xff]
    %v235 = vld [vmem:[%s2 + $0x70] sm:$0xff]
    %v236 = vld [vmem:[%s2 + $0x78] sm:$0xff]
    %v237 = vld [vmem:[%s3] sm:$0x1]
    %238 = vset.pattern.permute.xlu0 0
    %239 = vperm.xlu0 %238, %v221
    %v240 = vpop.permute.xlu0 %239
    %241 = vset.pattern.permute.xlu0 0
    %242 = vperm.xlu0 %241, %v222
    %v243 = vpop.permute.xlu0 %242
    %244 = vset.pattern.permute.xlu0 0
    %245 = vperm.xlu0 %244, %v223
    %v246 = vpop.permute.xlu0 %245
    %247 = vset.pattern.permute.xlu0 0
    %248 = vperm.xlu0 %247, %v224
    %v249 = vpop.permute.xlu0 %248
    %250 = vset.pattern.permute.xlu0 0
    %251 = vperm.xlu0 %250, %v225
    %v252 = vpop.permute.xlu0 %251
    %253 = vset.pattern.permute.xlu0 0
    %254 = vperm.xlu0 %253, %v226
    %v255 = vpop.permute.xlu0 %254
    %256 = vset.pattern.permute.xlu0 0
    %257 = vperm.xlu0 %256, %v227
    %v258 = vpop.permute.xlu0 %257
    %259 = vset.pattern.permute.xlu0 0
    %260 = vperm.xlu0 %259, %v228
    %v261 = vpop.permute.xlu0 %260
    %262 = vset.pattern.permute.xlu0 0
    %263 = vperm.xlu0 %262, %v229
    %v264 = vpop.permute.xlu0 %263
    %265 = vset.pattern.permute.xlu0 0
    %266 = vperm.xlu0 %265, %v230
    %v267 = vpop.permute.xlu0 %266
    %268 = vset.pattern.permute.xlu0 0
    %269 = vperm.xlu0 %268, %v231
    %v270 = vpop.permute.xlu0 %269
    %271 = vset.pattern.permute.xlu0 0
    %272 = vperm.xlu0 %271, %v232
    %v273 = vpop.permute.xlu0 %272
    %274 = vset.pattern.permute.xlu0 0
    %275 = vperm.xlu0 %274, %v233
    %v276 = vpop.permute.xlu0 %275
    %277 = vset.pattern.permute.xlu0 0
    %278 = vperm.xlu0 %277, %v234
    %v279 = vpop.permute.xlu0 %278
    %280 = vset.pattern.permute.xlu0 0
    %281 = vperm.xlu0 %280, %v235
    %v282 = vpop.permute.xlu0 %281
    %283 = vset.pattern.permute.xlu0 0
    %284 = vperm.xlu0 %283, %v236
    %v285 = vpop.permute.xlu0 %284
    %v286 = vperm.slane %v237, 0
    %vm287 = vcmp.eq.s32.totalorder %v240, %v286
    %vm288 = vcmp.eq.s32.totalorder %v243, %v286
    %vm289 = vcmp.eq.s32.totalorder %v246, %v286
    %vm290 = vcmp.eq.s32.totalorder %v249, %v286
    %vm291 = vcmp.eq.s32.totalorder %v252, %v286
    %vm292 = vcmp.eq.s32.totalorder %v255, %v286
    %vm293 = vcmp.eq.s32.totalorder %v258, %v286
    %vm294 = vcmp.eq.s32.totalorder %v261, %v286
    %vm295 = vcmp.eq.s32.totalorder %v264, %v286
    %vm296 = vcmp.eq.s32.totalorder %v267, %v286
    %vm297 = vcmp.eq.s32.totalorder %v270, %v286
    %vm298 = vcmp.eq.s32.totalorder %v273, %v286
    %vm299 = vcmp.eq.s32.totalorder %v276, %v286
    %vm300 = vcmp.eq.s32.totalorder %v279, %v286
    %vm301 = vcmp.eq.s32.totalorder %v282, %v286
    %vm302 = vcmp.eq.s32.totalorder %v285, %v286
    %vm303 = vmand %vm287, %vm205
    %vm304 = vmand %vm288, %vm206
    %vm305 = vmand %vm289, %vm207
    %vm306 = vmand %vm290, %vm208
    %vm307 = vmand %vm291, %vm209
    %vm308 = vmand %vm292, %vm210
    %vm309 = vmand %vm293, %vm211
    %vm310 = vmand %vm294, %vm212
    %vm311 = vmand %vm295, %vm213
    %vm312 = vmand %vm296, %vm214
    %vm313 = vmand %vm297, %vm215
    %vm314 = vmand %vm298, %vm216
    %vm315 = vmand %vm299, %vm217
    %vm316 = vmand %vm300, %vm218
    %vm317 = vmand %vm301, %vm219
    %vm318 = vmand %vm302, %vm220
    %v319 = vsel %vm303, 1.0, 0.0
    %v320 = vsel %vm304, 1.0, 0.0
    %v321 = vsel %vm305, 1.0, 0.0
    %v322 = vsel %vm306, 1.0, 0.0
    %v323 = vsel %vm307, 1.0, 0.0
    %v324 = vsel %vm308, 1.0, 0.0
    %v325 = vsel %vm309, 1.0, 0.0
    %v326 = vsel %vm310, 1.0, 0.0
    %v327 = vsel %vm311, 1.0, 0.0
    %v328 = vsel %vm312, 1.0, 0.0
    %v329 = vsel %vm313, 1.0, 0.0
    %v330 = vsel %vm314, 1.0, 0.0
    %v331 = vsel %vm315, 1.0, 0.0
    %v332 = vsel %vm316, 1.0, 0.0
    %v333 = vsel %vm317, 1.0, 0.0
    %v334 = vsel %vm318, 1.0, 0.0
    %p335 = scmp.eq.s32.totalorder 0, 0
    // Predicated region
    $region22: #{tpu_custom_call.1} parent=1 // pred_check
      %p336 = pneg %p335
    $region23: #{tpu_custom_call.1} parent=1 // pred_check_branch
      %338 = sbr.rel (%p336) target = $region25
    $region24: #{tpu_custom_call.1} parent=1 // pred_region
      %vm339 = vcmask 7168
      %340 = vst.msk [vmem:[#allocation2] sm:$0xff] %vm339, -inf
      %341 = vst.msk [vmem:[#allocation2 + $0x8] sm:$0xff] %vm339, -inf
      %342 = vst.msk [vmem:[#allocation2 + $0x10] sm:$0xff] %vm339, -inf
      %343 = vst.msk [vmem:[#allocation2 + $0x18] sm:$0xff] %vm339, -inf
      %344 = vst.msk [vmem:[#allocation2 + $0x20] sm:$0xff] %vm339, -inf
      %345 = vst.msk [vmem:[#allocation2 + $0x28] sm:$0xff] %vm339, -inf
      %346 = vst.msk [vmem:[#allocation2 + $0x30] sm:$0xff] %vm339, -inf
      %347 = vst.msk [vmem:[#allocation2 + $0x38] sm:$0xff] %vm339, -inf
      %348 = vst.msk [vmem:[#allocation2 + $0x40] sm:$0xff] %vm339, -inf
      %349 = vst.msk [vmem:[#allocation2 + $0x48] sm:$0xff] %vm339, -inf
      %350 = vst.msk [vmem:[#allocation2 + $0x50] sm:$0xff] %vm339, -inf
      %351 = vst.msk [vmem:[#allocation2 + $0x58] sm:$0xff] %vm339, -inf
      %352 = vst.msk [vmem:[#allocation2 + $0x60] sm:$0xff] %vm339, -inf
      %353 = vst.msk [vmem:[#allocation2 + $0x68] sm:$0xff] %vm339, -inf
      %354 = vst.msk [vmem:[#allocation2 + $0x70] sm:$0xff] %vm339, -inf
      %355 = vst.msk [vmem:[#allocation2 + $0x78] sm:$0xff] %vm339, -inf
      %356 = vst.msk [vmem:[#allocation3] sm:$0xff] %vm339, 0.0
      %357 = vst.msk [vmem:[#allocation3 + $0x8] sm:$0xff] %vm339, 0.0
      %358 = vst.msk [vmem:[#allocation3 + $0x10] sm:$0xff] %vm339, 0.0
      %359 = vst.msk [vmem:[#allocation3 + $0x18] sm:$0xff] %vm339, 0.0
      %360 = vst.msk [vmem:[#allocation3 + $0x20] sm:$0xff] %vm339, 0.0
      %361 = vst.msk [vmem:[#allocation3 + $0x28] sm:$0xff] %vm339, 0.0
      %362 = vst.msk [vmem:[#allocation3 + $0x30] sm:$0xff] %vm339, 0.0
      %363 = vst.msk [vmem:[#allocation3 + $0x38] sm:$0xff] %vm339, 0.0
      %364 = vst.msk [vmem:[#allocation3 + $0x40] sm:$0xff] %vm339, 0.0
      %365 = vst.msk [vmem:[#allocation3 + $0x48] sm:$0xff] %vm339, 0.0
      %366 = vst.msk [vmem:[#allocation3 + $0x50] sm:$0xff] %vm339, 0.0
      %367 = vst.msk [vmem:[#allocation3 + $0x58] sm:$0xff] %vm339, 0.0
      %368 = vst.msk [vmem:[#allocation3 + $0x60] sm:$0xff] %vm339, 0.0
      %369 = vst.msk [vmem:[#allocation3 + $0x68] sm:$0xff] %vm339, 0.0
      %370 = vst.msk [vmem:[#allocation3 + $0x70] sm:$0xff] %vm339, 0.0
      %371 = vst.msk [vmem:[#allocation3 + $0x78] sm:$0xff] %vm339, 0.0
      %372 = vst.msk [vmem:[#allocation4] sm:$0xff] %vm339, 0.0
      %373 = vst.msk [vmem:[#allocation4 + $0x8] sm:$0xff] %vm339, 0.0
      %374 = vst.msk [vmem:[#allocation4 + $0x10] sm:$0xff] %vm339, 0.0
      %375 = vst.msk [vmem:[#allocation4 + $0x18] sm:$0xff] %vm339, 0.0
      %376 = vst.msk [vmem:[#allocation4 + $0x20] sm:$0xff] %vm339, 0.0
      %377 = vst.msk [vmem:[#allocation4 + $0x28] sm:$0xff] %vm339, 0.0
      %378 = vst.msk [vmem:[#allocation4 + $0x30] sm:$0xff] %vm339, 0.0
      %379 = vst.msk [vmem:[#allocation4 + $0x38] sm:$0xff] %vm339, 0.0
      %380 = vst.msk [vmem:[#allocation4 + $0x40] sm:$0xff] %vm339, 0.0
      %381 = vst.msk [vmem:[#allocation4 + $0x48] sm:$0xff] %vm339, 0.0
      %382 = vst.msk [vmem:[#allocation4 + $0x50] sm:$0xff] %vm339, 0.0
      %383 = vst.msk [vmem:[#allocation4 + $0x58] sm:$0xff] %vm339, 0.0
      %384 = vst.msk [vmem:[#allocation4 + $0x60] sm:$0xff] %vm339, 0.0
      %385 = vst.msk [vmem:[#allocation4 + $0x68] sm:$0xff] %vm339, 0.0
      %386 = vst.msk [vmem:[#allocation4 + $0x70] sm:$0xff] %vm339, 0.0
      %387 = vst.msk [vmem:[#allocation4 + $0x78] sm:$0xff] %vm339, 0.0
      %388 = vst.msk [vmem:[#allocation5] sm:$0xff] %vm339, 0.0
      %389 = vst.msk [vmem:[#allocation5 + $0x8] sm:$0xff] %vm339, 0.0
      %390 = vst.msk [vmem:[#allocation5 + $0x10] sm:$0xff] %vm339, 0.0
      %391 = vst.msk [vmem:[#allocation5 + $0x18] sm:$0xff] %vm339, 0.0
      %392 = vst.msk [vmem:[#allocation5 + $0x20] sm:$0xff] %vm339, 0.0
      %393 = vst.msk [vmem:[#allocation5 + $0x28] sm:$0xff] %vm339, 0.0
      %394 = vst.msk [vmem:[#allocation5 + $0x30] sm:$0xff] %vm339, 0.0
      %395 = vst.msk [vmem:[#allocation5 + $0x38] sm:$0xff] %vm339, 0.0
      %396 = vst.msk [vmem:[#allocation5 + $0x40] sm:$0xff] %vm339, 0.0
      %397 = vst.msk [vmem:[#allocation5 + $0x48] sm:$0xff] %vm339, 0.0
      %398 = vst.msk [vmem:[#allocation5 + $0x50] sm:$0xff] %vm339, 0.0
      %399 = vst.msk [vmem:[#allocation5 + $0x58] sm:$0xff] %vm339, 0.0
      %400 = vst.msk [vmem:[#allocation5 + $0x60] sm:$0xff] %vm339, 0.0
      %401 = vst.msk [vmem:[#allocation5 + $0x68] sm:$0xff] %vm339, 0.0
      %402 = vst.msk [vmem:[#allocation5 + $0x70] sm:$0xff] %vm339, 0.0
      %403 = vst.msk [vmem:[#allocation5 + $0x78] sm:$0xff] %vm339, 0.0
    $region25: #{tpu_custom_call.1} parent=1 // pred_fallthru
      _
    %v404 = vld [vmem:[#allocation2] sm:$0xff]
    %v405 = vld [vmem:[#allocation2 + $0x8] sm:$0xff]
    %v406 = vld [vmem:[#allocation2 + $0x10] sm:$0xff]
    %v407 = vld [vmem:[#allocation2 + $0x18] sm:$0xff]
    %v408 = vld [vmem:[#allocation2 + $0x20] sm:$0xff]
    %v409 = vld [vmem:[#allocation2 + $0x28] sm:$0xff]
    %v410 = vld [vmem:[#allocation2 + $0x30] sm:$0xff]
    %v411 = vld [vmem:[#allocation2 + $0x38] sm:$0xff]
    %v412 = vld [vmem:[#allocation2 + $0x40] sm:$0xff]
    %v413 = vld [vmem:[#allocation2 + $0x48] sm:$0xff]
    %v414 = vld [vmem:[#allocation2 + $0x50] sm:$0xff]
    %v415 = vld [vmem:[#allocation2 + $0x58] sm:$0xff]
    %v416 = vld [vmem:[#allocation2 + $0x60] sm:$0xff]
    %v417 = vld [vmem:[#allocation2 + $0x68] sm:$0xff]
    %v418 = vld [vmem:[#allocation2 + $0x70] sm:$0xff]
    %v419 = vld [vmem:[#allocation2 + $0x78] sm:$0xff]
    %v420 = vsel %vm204, %v99, -inf
    %v421 = vsel %vm204, %v102, -inf
    %v422 = vsel %vm204, %v105, -inf
    %v423 = vsel %vm204, %v108, -inf
    %v424 = vsel %vm204, %v111, -inf
    %v425 = vsel %vm204, %v114, -inf
    %v426 = vsel %vm204, %v117, -inf
    %v427 = vsel %vm204, %v120, -inf
    %v428 = vsel %vm204, %v123, -inf
    %v429 = vsel %vm204, %v126, -inf
    %v430 = vsel %vm204, %v129, -inf
    %v431 = vsel %vm204, %v132, -inf
    %v432 = vsel %vm204, %v135, -inf
    %v433 = vsel %vm204, %v138, -inf
    %v434 = vsel %vm204, %v141, -inf
    %v435 = vsel %vm204, %v144, -inf
    %436 = vmax.xlane.f32.xlu0 %v420
    %v437 = vpop.xlane.xlu0 %436
    %438 = vmax.xlane.f32.xlu0 %v421
    %v439 = vpop.xlane.xlu0 %438
    %440 = vmax.xlane.f32.xlu0 %v422
    %v441 = vpop.xlane.xlu0 %440
    %442 = vmax.xlane.f32.xlu0 %v423
    %v443 = vpop.xlane.xlu0 %442
    %444 = vmax.xlane.f32.xlu0 %v424
    %v445 = vpop.xlane.xlu0 %444
    %446 = vmax.xlane.f32.xlu0 %v425
    %v447 = vpop.xlane.xlu0 %446
    %448 = vmax.xlane.f32.xlu0 %v426
    %v449 = vpop.xlane.xlu0 %448
    %450 = vmax.xlane.f32.xlu0 %v427
    %v451 = vpop.xlane.xlu0 %450
    %452 = vmax.xlane.f32.xlu0 %v428
    %v453 = vpop.xlane.xlu0 %452
    %454 = vmax.xlane.f32.xlu0 %v429
    %v455 = vpop.xlane.xlu0 %454
    %456 = vmax.xlane.f32.xlu0 %v430
    %v457 = vpop.xlane.xlu0 %456
    %458 = vmax.xlane.f32.xlu0 %v431
    %v459 = vpop.xlane.xlu0 %458
    %460 = vmax.xlane.f32.xlu0 %v432
    %v461 = vpop.xlane.xlu0 %460
    %462 = vmax.xlane.f32.xlu0 %v433
    %v463 = vpop.xlane.xlu0 %462
    %464 = vmax.xlane.f32.xlu0 %v434
    %v465 = vpop.xlane.xlu0 %464
    %466 = vmax.xlane.f32.xlu0 %v435
    %v467 = vpop.xlane.xlu0 %466
    %v468 = vmax.f32 %v404, %v437
    %v469 = vmax.f32 %v405, %v439
    %v470 = vmax.f32 %v406, %v441
    %v471 = vmax.f32 %v407, %v443
    %v472 = vmax.f32 %v408, %v445
    %v473 = vmax.f32 %v409, %v447
    %v474 = vmax.f32 %v410, %v449
    %v475 = vmax.f32 %v411, %v451
    %v476 = vmax.f32 %v412, %v453
    %v477 = vmax.f32 %v413, %v455
    %v478 = vmax.f32 %v414, %v457
    %v479 = vmax.f32 %v415, %v459
    %v480 = vmax.f32 %v416, %v461
    %v481 = vmax.f32 %v417, %v463
    %v482 = vmax.f32 %v418, %v465
    %v483 = vmax.f32 %v419, %v467
    %v484 = vsub.f32 %v404, %v468
    %v485 = vsub.f32 %v405, %v469
    %v486 = vsub.f32 %v406, %v470
    %v487 = vsub.f32 %v407, %v471
    %v488 = vsub.f32 %v408, %v472
    %v489 = vsub.f32 %v409, %v473
    %v490 = vsub.f32 %v410, %v474
    %v491 = vsub.f32 %v411, %v475
    %v492 = vsub.f32 %v412, %v476
    %v493 = vsub.f32 %v413, %v477
    %v494 = vsub.f32 %v414, %v478
    %v495 = vsub.f32 %v415, %v479
    %v496 = vsub.f32 %v416, %v480
    %v497 = vsub.f32 %v417, %v481
    %v498 = vsub.f32 %v418, %v482
    %v499 = vsub.f32 %v419, %v483
    %v500 = vmul.f32 %v484, 1.442695
    %v501 = vpow.pop %v500
    %v502 = vmul.f32 %v485, 1.442695
    %v503 = vpow.pop %v502
    %v504 = vmul.f32 %v486, 1.442695
    %v505 = vpow.pop %v504
    %v506 = vmul.f32 %v487, 1.442695
    %v507 = vpow.pop %v506
    %v508 = vmul.f32 %v488, 1.442695
    %v509 = vpow.pop %v508
    %v510 = vmul.f32 %v489, 1.442695
    %v511 = vpow.pop %v510
    %v512 = vmul.f32 %v490, 1.442695
    %v513 = vpow.pop %v512
    %v514 = vmul.f32 %v491, 1.442695
    %v515 = vpow.pop %v514
    %v516 = vmul.f32 %v492, 1.442695
    %v517 = vpow.pop %v516
    %v518 = vmul.f32 %v493, 1.442695
    %v519 = vpow.pop %v518
    %v520 = vmul.f32 %v494, 1.442695
    %v521 = vpow.pop %v520
    %v522 = vmul.f32 %v495, 1.442695
    %v523 = vpow.pop %v522
    %v524 = vmul.f32 %v496, 1.442695
    %v525 = vpow.pop %v524
    %v526 = vmul.f32 %v497, 1.442695
    %v527 = vpow.pop %v526
    %v528 = vmul.f32 %v498, 1.442695
    %v529 = vpow.pop %v528
    %v530 = vmul.f32 %v499, 1.442695
    %v531 = vpow.pop %v530
    %533 = vset.pattern.permute.xlu0 0
    %534 = vperm.xlu0 %533, %v468
    %v535 = vpop.permute.xlu0 %534
    %538 = vset.pattern.permute.xlu0 0
    %539 = vperm.xlu0 %538, %v469
    %v540 = vpop.permute.xlu0 %539
    %543 = vset.pattern.permute.xlu0 0
    %544 = vperm.xlu0 %543, %v470
    %v545 = vpop.permute.xlu0 %544
    %548 = vset.pattern.permute.xlu0 0
    %549 = vperm.xlu0 %548, %v471
    %v550 = vpop.permute.xlu0 %549
    %553 = vset.pattern.permute.xlu0 0
    %554 = vperm.xlu0 %553, %v472
    %v555 = vpop.permute.xlu0 %554
    %558 = vset.pattern.permute.xlu0 0
    %559 = vperm.xlu0 %558, %v473
    %v560 = vpop.permute.xlu0 %559
    %563 = vset.pattern.permute.xlu0 0
    %564 = vperm.xlu0 %563, %v474
    %v565 = vpop.permute.xlu0 %564
    %568 = vset.pattern.permute.xlu0 0
    %569 = vperm.xlu0 %568, %v475
    %v570 = vpop.permute.xlu0 %569
    %573 = vset.pattern.permute.xlu0 0
    %574 = vperm.xlu0 %573, %v476
    %v575 = vpop.permute.xlu0 %574
    %578 = vset.pattern.permute.xlu0 0
    %579 = vperm.xlu0 %578, %v477
    %v580 = vpop.permute.xlu0 %579
    %583 = vset.pattern.permute.xlu0 0
    %584 = vperm.xlu0 %583, %v478
    %v585 = vpop.permute.xlu0 %584
    %588 = vset.pattern.permute.xlu0 0
    %589 = vperm.xlu0 %588, %v479
    %v590 = vpop.permute.xlu0 %589
    %593 = vset.pattern.permute.xlu0 0
    %594 = vperm.xlu0 %593, %v480
    %v595 = vpop.permute.xlu0 %594
    %598 = vset.pattern.permute.xlu0 0
    %599 = vperm.xlu0 %598, %v481
    %v600 = vpop.permute.xlu0 %599
    %603 = vset.pattern.permute.xlu0 0
    %604 = vperm.xlu0 %603, %v482
    %v605 = vpop.permute.xlu0 %604
    %608 = vset.pattern.permute.xlu0 0
    %609 = vperm.xlu0 %608, %v483
    %v610 = vpop.permute.xlu0 %609
    %v612 = vsub.f32 %v99, %v535
    %v613 = vsub.f32 %v102, %v540
    %v614 = vsub.f32 %v105, %v545
    %v615 = vsub.f32 %v108, %v550
    %v616 = vsub.f32 %v111, %v555
    %v617 = vsub.f32 %v114, %v560
    %v618 = vsub.f32 %v117, %v565
    %v619 = vsub.f32 %v120, %v570
    %v620 = vsub.f32 %v123, %v575
    %v621 = vsub.f32 %v126, %v580
    %v622 = vsub.f32 %v129, %v585
    %v623 = vsub.f32 %v132, %v590
    %v624 = vsub.f32 %v135, %v595
    %v625 = vsub.f32 %v138, %v600
    %v626 = vsub.f32 %v141, %v605
    %v627 = vsub.f32 %v144, %v610
    %v628 = vmul.f32 %v612, 1.442695
    %v629 = vpow.pop %v628
    %v630 = vmul.f32 %v613, 1.442695
    %v631 = vpow.pop %v630
    %v632 = vmul.f32 %v614, 1.442695
    %v633 = vpow.pop %v632
    %v634 = vmul.f32 %v615, 1.442695
    %v635 = vpow.pop %v634
    %v636 = vmul.f32 %v616, 1.442695
    %v637 = vpow.pop %v636
    %v638 = vmul.f32 %v617, 1.442695
    %v639 = vpow.pop %v638
    %v640 = vmul.f32 %v618, 1.442695
    %v641 = vpow.pop %v640
    %v642 = vmul.f32 %v619, 1.442695
    %v643 = vpow.pop %v642
    %v644 = vmul.f32 %v620, 1.442695
    %v645 = vpow.pop %v644
    %v646 = vmul.f32 %v621, 1.442695
    %v647 = vpow.pop %v646
    %v648 = vmul.f32 %v622, 1.442695
    %v649 = vpow.pop %v648
    %v650 = vmul.f32 %v623, 1.442695
    %v651 = vpow.pop %v650
    %v652 = vmul.f32 %v624, 1.442695
    %v653 = vpow.pop %v652
    %v654 = vmul.f32 %v625, 1.442695
    %v655 = vpow.pop %v654
    %v656 = vmul.f32 %v626, 1.442695
    %v657 = vpow.pop %v656
    %v658 = vmul.f32 %v627, 1.442695
    %v659 = vpow.pop %v658
    %v660 = vsel %vm205, %v629, 0.0
    %v661 = vsel %vm206, %v631, 0.0
    %v662 = vsel %vm207, %v633, 0.0
    %v663 = vsel %vm208, %v635, 0.0
    %v664 = vsel %vm209, %v637, 0.0
    %v665 = vsel %vm210, %v639, 0.0
    %v666 = vsel %vm211, %v641, 0.0
    %v667 = vsel %vm212, %v643, 0.0
    %v668 = vsel %vm213, %v645, 0.0
    %v669 = vsel %vm214, %v647, 0.0
    %v670 = vsel %vm215, %v649, 0.0
    %v671 = vsel %vm216, %v651, 0.0
    %v672 = vsel %vm217, %v653, 0.0
    %v673 = vsel %vm218, %v655, 0.0
    %v674 = vsel %vm219, %v657, 0.0
    %v675 = vsel %vm220, %v659, 0.0
    %v676 = vld [vmem:[#allocation3] sm:$0xff]
    %v677 = vld [vmem:[#allocation3 + $0x8] sm:$0xff]
    %v678 = vld [vmem:[#allocation3 + $0x10] sm:$0xff]
    %v679 = vld [vmem:[#allocation3 + $0x18] sm:$0xff]
    %v680 = vld [vmem:[#allocation3 + $0x20] sm:$0xff]
    %v681 = vld [vmem:[#allocation3 + $0x28] sm:$0xff]
    %v682 = vld [vmem:[#allocation3 + $0x30] sm:$0xff]
    %v683 = vld [vmem:[#allocation3 + $0x38] sm:$0xff]
    %v684 = vld [vmem:[#allocation3 + $0x40] sm:$0xff]
    %v685 = vld [vmem:[#allocation3 + $0x48] sm:$0xff]
    %v686 = vld [vmem:[#allocation3 + $0x50] sm:$0xff]
    %v687 = vld [vmem:[#allocation3 + $0x58] sm:$0xff]
    %v688 = vld [vmem:[#allocation3 + $0x60] sm:$0xff]
    %v689 = vld [vmem:[#allocation3 + $0x68] sm:$0xff]
    %v690 = vld [vmem:[#allocation3 + $0x70] sm:$0xff]
    %v691 = vld [vmem:[#allocation3 + $0x78] sm:$0xff]
    %v692 = vmul.f32 %v501, %v676
    %v693 = vmul.f32 %v503, %v677
    %v694 = vmul.f32 %v505, %v678
    %v695 = vmul.f32 %v507, %v679
    %v696 = vmul.f32 %v509, %v680
    %v697 = vmul.f32 %v511, %v681
    %v698 = vmul.f32 %v513, %v682
    %v699 = vmul.f32 %v515, %v683
    %v700 = vmul.f32 %v517, %v684
    %v701 = vmul.f32 %v519, %v685
    %v702 = vmul.f32 %v521, %v686
    %v703 = vmul.f32 %v523, %v687
    %v704 = vmul.f32 %v525, %v688
    %v705 = vmul.f32 %v527, %v689
    %v706 = vmul.f32 %v529, %v690
    %v707 = vmul.f32 %v531, %v691
    %708 = vadd.xlane.f32.xlu0 %v660
    %v709 = vpop.xlane.xlu0 %708
    %710 = vadd.xlane.f32.xlu0 %v661
    %v711 = vpop.xlane.xlu0 %710
    %712 = vadd.xlane.f32.xlu0 %v662
    %v713 = vpop.xlane.xlu0 %712
    %714 = vadd.xlane.f32.xlu0 %v663
    %v715 = vpop.xlane.xlu0 %714
    %716 = vadd.xlane.f32.xlu0 %v664
    %v717 = vpop.xlane.xlu0 %716
    %718 = vadd.xlane.f32.xlu0 %v665
    %v719 = vpop.xlane.xlu0 %718
    %720 = vadd.xlane.f32.xlu0 %v666
    %v721 = vpop.xlane.xlu0 %720
    %722 = vadd.xlane.f32.xlu0 %v667
    %v723 = vpop.xlane.xlu0 %722
    %724 = vadd.xlane.f32.xlu0 %v668
    %v725 = vpop.xlane.xlu0 %724
    %726 = vadd.xlane.f32.xlu0 %v669
    %v727 = vpop.xlane.xlu0 %726
    %728 = vadd.xlane.f32.xlu0 %v670
    %v729 = vpop.xlane.xlu0 %728
    %730 = vadd.xlane.f32.xlu0 %v671
    %v731 = vpop.xlane.xlu0 %730
    %732 = vadd.xlane.f32.xlu0 %v672
    %v733 = vpop.xlane.xlu0 %732
    %734 = vadd.xlane.f32.xlu0 %v673
    %v735 = vpop.xlane.xlu0 %734
    %736 = vadd.xlane.f32.xlu0 %v674
    %v737 = vpop.xlane.xlu0 %736
    %738 = vadd.xlane.f32.xlu0 %v675
    %v739 = vpop.xlane.xlu0 %738
    %v740 = vadd.f32 %v692, %v709
    %v741 = vadd.f32 %v693, %v711
    %v742 = vadd.f32 %v694, %v713
    %v743 = vadd.f32 %v695, %v715
    %v744 = vadd.f32 %v696, %v717
    %v745 = vadd.f32 %v697, %v719
    %v746 = vadd.f32 %v698, %v721
    %v747 = vadd.f32 %v699, %v723
    %v748 = vadd.f32 %v700, %v725
    %v749 = vadd.f32 %v701, %v727
    %v750 = vadd.f32 %v702, %v729
    %v751 = vadd.f32 %v703, %v731
    %v752 = vadd.f32 %v704, %v733
    %v753 = vadd.f32 %v705, %v735
    %v754 = vadd.f32 %v706, %v737
    %v755 = vadd.f32 %v707, %v739
    %vm756 = vcmask 7168
    %757 = vst.msk [vmem:[#allocation3] sm:$0xff] %vm756, %v740
    %758 = vst.msk [vmem:[#allocation3 + $0x8] sm:$0xff] %vm756, %v741
    %759 = vst.msk [vmem:[#allocation3 + $0x10] sm:$0xff] %vm756, %v742
    %760 = vst.msk [vmem:[#allocation3 + $0x18] sm:$0xff] %vm756, %v743
    %761 = vst.msk [vmem:[#allocation3 + $0x20] sm:$0xff] %vm756, %v744
    %762 = vst.msk [vmem:[#allocation3 + $0x28] sm:$0xff] %vm756, %v745
    %763 = vst.msk [vmem:[#allocation3 + $0x30] sm:$0xff] %vm756, %v746
    %764 = vst.msk [vmem:[#allocation3 + $0x38] sm:$0xff] %vm756, %v747
    %765 = vst.msk [vmem:[#allocation3 + $0x40] sm:$0xff] %vm756, %v748
    %766 = vst.msk [vmem:[#allocation3 + $0x48] sm:$0xff] %vm756, %v749
    %767 = vst.msk [vmem:[#allocation3 + $0x50] sm:$0xff] %vm756, %v750
    %768 = vst.msk [vmem:[#allocation3 + $0x58] sm:$0xff] %vm756, %v751
    %769 = vst.msk [vmem:[#allocation3 + $0x60] sm:$0xff] %vm756, %v752
    %770 = vst.msk [vmem:[#allocation3 + $0x68] sm:$0xff] %vm756, %v753
    %771 = vst.msk [vmem:[#allocation3 + $0x70] sm:$0xff] %vm756, %v754
    %772 = vst.msk [vmem:[#allocation3 + $0x78] sm:$0xff] %vm756, %v755
    %773 = vst.msk [vmem:[#allocation2] sm:$0xff] %vm756, %v468
    %774 = vst.msk [vmem:[#allocation2 + $0x8] sm:$0xff] %vm756, %v469
    %775 = vst.msk [vmem:[#allocation2 + $0x10] sm:$0xff] %vm756, %v470
    %776 = vst.msk [vmem:[#allocation2 + $0x18] sm:$0xff] %vm756, %v471
    %777 = vst.msk [vmem:[#allocation2 + $0x20] sm:$0xff] %vm756, %v472
    %778 = vst.msk [vmem:[#allocation2 + $0x28] sm:$0xff] %vm756, %v473
    %779 = vst.msk [vmem:[#allocation2 + $0x30] sm:$0xff] %vm756, %v474
    %780 = vst.msk [vmem:[#allocation2 + $0x38] sm:$0xff] %vm756, %v475
    %781 = vst.msk [vmem:[#allocation2 + $0x40] sm:$0xff] %vm756, %v476
    %782 = vst.msk [vmem:[#allocation2 + $0x48] sm:$0xff] %vm756, %v477
    %783 = vst.msk [vmem:[#allocation2 + $0x50] sm:$0xff] %vm756, %v478
    %784 = vst.msk [vmem:[#allocation2 + $0x58] sm:$0xff] %vm756, %v479
    %785 = vst.msk [vmem:[#allocation2 + $0x60] sm:$0xff] %vm756, %v480
    %786 = vst.msk [vmem:[#allocation2 + $0x68] sm:$0xff] %vm756, %v481
    %787 = vst.msk [vmem:[#allocation2 + $0x70] sm:$0xff] %vm756, %v482
    %788 = vst.msk [vmem:[#allocation2 + $0x78] sm:$0xff] %vm756, %v483
    %v789 = vld [vmem:[#allocation4] sm:$0xff]
    %v790 = vld [vmem:[#allocation4 + $0x8] sm:$0xff]
    %v791 = vld [vmem:[#allocation4 + $0x10] sm:$0xff]
    %v792 = vld [vmem:[#allocation4 + $0x18] sm:$0xff]
    %v793 = vld [vmem:[#allocation4 + $0x20] sm:$0xff]
    %v794 = vld [vmem:[#allocation4 + $0x28] sm:$0xff]
    %v795 = vld [vmem:[#allocation4 + $0x30] sm:$0xff]
    %v796 = vld [vmem:[#allocation4 + $0x38] sm:$0xff]
    %v797 = vld [vmem:[#allocation4 + $0x40] sm:$0xff]
    %v798 = vld [vmem:[#allocation4 + $0x48] sm:$0xff]
    %v799 = vld [vmem:[#allocation4 + $0x50] sm:$0xff]
    %v800 = vld [vmem:[#allocation4 + $0x58] sm:$0xff]
    %v801 = vld [vmem:[#allocation4 + $0x60] sm:$0xff]
    %v802 = vld [vmem:[#allocation4 + $0x68] sm:$0xff]
    %v803 = vld [vmem:[#allocation4 + $0x70] sm:$0xff]
    %v804 = vld [vmem:[#allocation4 + $0x78] sm:$0xff]
    %v805 = vmul.f32 %v319, %v99
    %v806 = vmul.f32 %v320, %v102
    %v807 = vmul.f32 %v321, %v105
    %v808 = vmul.f32 %v322, %v108
    %v809 = vmul.f32 %v323, %v111
    %v810 = vmul.f32 %v324, %v114
    %v811 = vmul.f32 %v325, %v117
    %v812 = vmul.f32 %v326, %v120
    %v813 = vmul.f32 %v327, %v123
    %v814 = vmul.f32 %v328, %v126
    %v815 = vmul.f32 %v329, %v129
    %v816 = vmul.f32 %v330, %v132
    %v817 = vmul.f32 %v331, %v135
    %v818 = vmul.f32 %v332, %v138
    %v819 = vmul.f32 %v333, %v141
    %v820 = vmul.f32 %v334, %v144
    %821 = vadd.xlane.f32.xlu0 %v805
    %v822 = vpop.xlane.xlu0 %821
    %823 = vadd.xlane.f32.xlu0 %v806
    %v824 = vpop.xlane.xlu0 %823
    %825 = vadd.xlane.f32.xlu0 %v807
    %v826 = vpop.xlane.xlu0 %825
    %827 = vadd.xlane.f32.xlu0 %v808
    %v828 = vpop.xlane.xlu0 %827
    %829 = vadd.xlane.f32.xlu0 %v809
    %v830 = vpop.xlane.xlu0 %829
    %831 = vadd.xlane.f32.xlu0 %v810
    %v832 = vpop.xlane.xlu0 %831
    %833 = vadd.xlane.f32.xlu0 %v811
    %v834 = vpop.xlane.xlu0 %833
    %835 = vadd.xlane.f32.xlu0 %v812
    %v836 = vpop.xlane.xlu0 %835
    %837 = vadd.xlane.f32.xlu0 %v813
    %v838 = vpop.xlane.xlu0 %837
    %839 = vadd.xlane.f32.xlu0 %v814
    %v840 = vpop.xlane.xlu0 %839
    %841 = vadd.xlane.f32.xlu0 %v815
    %v842 = vpop.xlane.xlu0 %841
    %843 = vadd.xlane.f32.xlu0 %v816
    %v844 = vpop.xlane.xlu0 %843
    %845 = vadd.xlane.f32.xlu0 %v817
    %v846 = vpop.xlane.xlu0 %845
    %847 = vadd.xlane.f32.xlu0 %v818
    %v848 = vpop.xlane.xlu0 %847
    %849 = vadd.xlane.f32.xlu0 %v819
    %v850 = vpop.xlane.xlu0 %849
    %851 = vadd.xlane.f32.xlu0 %v820
    %v852 = vpop.xlane.xlu0 %851
    %v853 = vadd.f32 %v789, %v822
    %v854 = vadd.f32 %v790, %v824
    %v855 = vadd.f32 %v791, %v826
    %v856 = vadd.f32 %v792, %v828
    %v857 = vadd.f32 %v793, %v830
    %v858 = vadd.f32 %v794, %v832
    %v859 = vadd.f32 %v795, %v834
    %v860 = vadd.f32 %v796, %v836
    %v861 = vadd.f32 %v797, %v838
    %v862 = vadd.f32 %v798, %v840
    %v863 = vadd.f32 %v799, %v842
    %v864 = vadd.f32 %v800, %v844
    %v865 = vadd.f32 %v801, %v846
    %v866 = vadd.f32 %v802, %v848
    %v867 = vadd.f32 %v803, %v850
    %v868 = vadd.f32 %v804, %v852
    %869 = vst.msk [vmem:[#allocation4] sm:$0xff] %vm756, %v853
    %870 = vst.msk [vmem:[#allocation4 + $0x8] sm:$0xff] %vm756, %v854
    %871 = vst.msk [vmem:[#allocation4 + $0x10] sm:$0xff] %vm756, %v855
    %872 = vst.msk [vmem:[#allocation4 + $0x18] sm:$0xff] %vm756, %v856
    %873 = vst.msk [vmem:[#allocation4 + $0x20] sm:$0xff] %vm756, %v857
    %874 = vst.msk [vmem:[#allocation4 + $0x28] sm:$0xff] %vm756, %v858
    %875 = vst.msk [vmem:[#allocation4 + $0x30] sm:$0xff] %vm756, %v859
    %876 = vst.msk [vmem:[#allocation4 + $0x38] sm:$0xff] %vm756, %v860
    %877 = vst.msk [vmem:[#allocation4 + $0x40] sm:$0xff] %vm756, %v861
    %878 = vst.msk [vmem:[#allocation4 + $0x48] sm:$0xff] %vm756, %v862
    %879 = vst.msk [vmem:[#allocation4 + $0x50] sm:$0xff] %vm756, %v863
    %880 = vst.msk [vmem:[#allocation4 + $0x58] sm:$0xff] %vm756, %v864
    %881 = vst.msk [vmem:[#allocation4 + $0x60] sm:$0xff] %vm756, %v865
    %882 = vst.msk [vmem:[#allocation4 + $0x68] sm:$0xff] %vm756, %v866
    %883 = vst.msk [vmem:[#allocation4 + $0x70] sm:$0xff] %vm756, %v867
    %884 = vst.msk [vmem:[#allocation4 + $0x78] sm:$0xff] %vm756, %v868
    %v885 = vld [vmem:[#allocation5] sm:$0xff]
    %v886 = vld [vmem:[#allocation5 + $0x8] sm:$0xff]
    %v887 = vld [vmem:[#allocation5 + $0x10] sm:$0xff]
    %v888 = vld [vmem:[#allocation5 + $0x18] sm:$0xff]
    %v889 = vld [vmem:[#allocation5 + $0x20] sm:$0xff]
    %v890 = vld [vmem:[#allocation5 + $0x28] sm:$0xff]
    %v891 = vld [vmem:[#allocation5 + $0x30] sm:$0xff]
    %v892 = vld [vmem:[#allocation5 + $0x38] sm:$0xff]
    %v893 = vld [vmem:[#allocation5 + $0x40] sm:$0xff]
    %v894 = vld [vmem:[#allocation5 + $0x48] sm:$0xff]
    %v895 = vld [vmem:[#allocation5 + $0x50] sm:$0xff]
    %v896 = vld [vmem:[#allocation5 + $0x58] sm:$0xff]
    %v897 = vld [vmem:[#allocation5 + $0x60] sm:$0xff]
    %v898 = vld [vmem:[#allocation5 + $0x68] sm:$0xff]
    %v899 = vld [vmem:[#allocation5 + $0x70] sm:$0xff]
    %v900 = vld [vmem:[#allocation5 + $0x78] sm:$0xff]
    %901 = vadd.xlane.f32.xlu0 %v319
    %v902 = vpop.xlane.xlu0 %901
    %903 = vadd.xlane.f32.xlu0 %v320
    %v904 = vpop.xlane.xlu0 %903
    %905 = vadd.xlane.f32.xlu0 %v321
    %v906 = vpop.xlane.xlu0 %905
    %907 = vadd.xlane.f32.xlu0 %v322
    %v908 = vpop.xlane.xlu0 %907
    %909 = vadd.xlane.f32.xlu0 %v323
    %v910 = vpop.xlane.xlu0 %909
    %911 = vadd.xlane.f32.xlu0 %v324
    %v912 = vpop.xlane.xlu0 %911
    %913 = vadd.xlane.f32.xlu0 %v325
    %v914 = vpop.xlane.xlu0 %913
    %915 = vadd.xlane.f32.xlu0 %v326
    %v916 = vpop.xlane.xlu0 %915
    %917 = vadd.xlane.f32.xlu0 %v327
    %v918 = vpop.xlane.xlu0 %917
    %919 = vadd.xlane.f32.xlu0 %v328
    %v920 = vpop.xlane.xlu0 %919
    %921 = vadd.xlane.f32.xlu0 %v329
    %v922 = vpop.xlane.xlu0 %921
    %923 = vadd.xlane.f32.xlu0 %v330
    %v924 = vpop.xlane.xlu0 %923
    %925 = vadd.xlane.f32.xlu0 %v331
    %v926 = vpop.xlane.xlu0 %925
    %927 = vadd.xlane.f32.xlu0 %v332
    %v928 = vpop.xlane.xlu0 %927
    %929 = vadd.xlane.f32.xlu0 %v333
    %v930 = vpop.xlane.xlu0 %929
    %931 = vadd.xlane.f32.xlu0 %v334
    %v932 = vpop.xlane.xlu0 %931
    %v933 = vadd.f32 %v885, %v902
    %v934 = vadd.f32 %v886, %v904
    %v935 = vadd.f32 %v887, %v906
    %v936 = vadd.f32 %v888, %v908
    %v937 = vadd.f32 %v889, %v910
    %v938 = vadd.f32 %v890, %v912
    %v939 = vadd.f32 %v891, %v914
    %v940 = vadd.f32 %v892, %v916
    %v941 = vadd.f32 %v893, %v918
    %v942 = vadd.f32 %v894, %v920
    %v943 = vadd.f32 %v895, %v922
    %v944 = vadd.f32 %v896, %v924
    %v945 = vadd.f32 %v897, %v926
    %v946 = vadd.f32 %v898, %v928
    %v947 = vadd.f32 %v899, %v930
    %v948 = vadd.f32 %v900, %v932
    %949 = vst.msk [vmem:[#allocation5] sm:$0xff] %vm756, %v933
    %950 = vst.msk [vmem:[#allocation5 + $0x8] sm:$0xff] %vm756, %v934
    %951 = vst.msk [vmem:[#allocation5 + $0x10] sm:$0xff] %vm756, %v935
    %952 = vst.msk [vmem:[#allocation5 + $0x18] sm:$0xff] %vm756, %v936
    %953 = vst.msk [vmem:[#allocation5 + $0x20] sm:$0xff] %vm756, %v937
    %954 = vst.msk [vmem:[#allocation5 + $0x28] sm:$0xff] %vm756, %v938
    %955 = vst.msk [vmem:[#allocation5 + $0x30] sm:$0xff] %vm756, %v939
    %956 = vst.msk [vmem:[#allocation5 + $0x38] sm:$0xff] %vm756, %v940
    %957 = vst.msk [vmem:[#allocation5 + $0x40] sm:$0xff] %vm756, %v941
    %958 = vst.msk [vmem:[#allocation5 + $0x48] sm:$0xff] %vm756, %v942
    %959 = vst.msk [vmem:[#allocation5 + $0x50] sm:$0xff] %vm756, %v943
    %960 = vst.msk [vmem:[#allocation5 + $0x58] sm:$0xff] %vm756, %v944
    %961 = vst.msk [vmem:[#allocation5 + $0x60] sm:$0xff] %vm756, %v945
    %962 = vst.msk [vmem:[#allocation5 + $0x68] sm:$0xff] %vm756, %v946
    %963 = vst.msk [vmem:[#allocation5 + $0x70] sm:$0xff] %vm756, %v947
    %964 = vst.msk [vmem:[#allocation5 + $0x78] sm:$0xff] %vm756, %v948
    // Predicated region
    $region26: #{tpu_custom_call.1} parent=1 // pred_check
      %p965 = pneg %p335
    $region27: #{tpu_custom_call.1} parent=1 // pred_check_branch
      %967 = sbr.rel (%p965) target = $region29
    $region28: #{tpu_custom_call.1} parent=1 // pred_region
      %v968 = vld [vmem:[#allocation4] sm:$0xff]
      %v969 = vld [vmem:[#allocation4 + $0x8] sm:$0xff]
      %v970 = vld [vmem:[#allocation4 + $0x10] sm:$0xff]
      %v971 = vld [vmem:[#allocation4 + $0x18] sm:$0xff]
      %v972 = vld [vmem:[#allocation4 + $0x20] sm:$0xff]
      %v973 = vld [vmem:[#allocation4 + $0x28] sm:$0xff]
      %v974 = vld [vmem:[#allocation4 + $0x30] sm:$0xff]
      %v975 = vld [vmem:[#allocation4 + $0x38] sm:$0xff]
      %v976 = vld [vmem:[#allocation4 + $0x40] sm:$0xff]
      %v977 = vld [vmem:[#allocation4 + $0x48] sm:$0xff]
      %v978 = vld [vmem:[#allocation4 + $0x50] sm:$0xff]
      %v979 = vld [vmem:[#allocation4 + $0x58] sm:$0xff]
      %v980 = vld [vmem:[#allocation4 + $0x60] sm:$0xff]
      %v981 = vld [vmem:[#allocation4 + $0x68] sm:$0xff]
      %v982 = vld [vmem:[#allocation4 + $0x70] sm:$0xff]
      %v983 = vld [vmem:[#allocation4 + $0x78] sm:$0xff]
      %v984 = vld [vmem:[#allocation5] sm:$0xff]
      %v985 = vld [vmem:[#allocation5 + $0x8] sm:$0xff]
      %v986 = vld [vmem:[#allocation5 + $0x10] sm:$0xff]
      %v987 = vld [vmem:[#allocation5 + $0x18] sm:$0xff]
      %v988 = vld [vmem:[#allocation5 + $0x20] sm:$0xff]
      %v989 = vld [vmem:[#allocation5 + $0x28] sm:$0xff]
      %v990 = vld [vmem:[#allocation5 + $0x30] sm:$0xff]
      %v991 = vld [vmem:[#allocation5 + $0x38] sm:$0xff]
      %v992 = vld [vmem:[#allocation5 + $0x40] sm:$0xff]
      %v993 = vld [vmem:[#allocation5 + $0x48] sm:$0xff]
      %v994 = vld [vmem:[#allocation5 + $0x50] sm:$0xff]
      %v995 = vld [vmem:[#allocation5 + $0x58] sm:$0xff]
      %v996 = vld [vmem:[#allocation5 + $0x60] sm:$0xff]
      %v997 = vld [vmem:[#allocation5 + $0x68] sm:$0xff]
      %v998 = vld [vmem:[#allocation5 + $0x70] sm:$0xff]
      %v999 = vld [vmem:[#allocation5 + $0x78] sm:$0xff]
      %v1000 = vrcp.pop %v984
      %v1001 = vmul.f32 %v984, %v1000
      %v1002 = vsub.f32 1.0, %v1001
      %v1003 = vmul.f32 %v1000, %v1002
      %v1004 = vadd.f32 %v1000, %v1003
      %vm1005 = vweird.f32 %v984
      %vm1006 = vweird.f32 %v1000
      %vm1007 = vmor %vm1005, %vm1006
      %v1008 = vsel %vm1007, %v1000, %v1004
      %v1009 = vand.u32 2147483647, %v984
      %vm1010 = vcmp.eq.f32.partialorder %v1009, 8.507059e+37
      %v1011 = vand.u32 %v984, 2147483648
      %v1012 = vor.u32 1.1754944e-38, %v1011
      %v1013 = vsel %vm1010, %v1012, %v1008
      %v1014 = vmul.f32 %v968, %v1013
      %v1015 = vrcp.pop %v985
      %v1016 = vmul.f32 %v985, %v1015
      %v1017 = vsub.f32 1.0, %v1016
      %v1018 = vmul.f32 %v1015, %v1017
      %v1019 = vadd.f32 %v1015, %v1018
      %vm1020 = vweird.f32 %v985
      %vm1021 = vweird.f32 %v1015
      %vm1022 = vmor %vm1020, %vm1021
      %v1023 = vsel %vm1022, %v1015, %v1019
      %v1024 = vand.u32 2147483647, %v985
      %vm1025 = vcmp.eq.f32.partialorder %v1024, 8.507059e+37
      %v1026 = vand.u32 %v985, 2147483648
      %v1027 = vor.u32 1.1754944e-38, %v1026
      %v1028 = vsel %vm1025, %v1027, %v1023
      %v1029 = vmul.f32 %v969, %v1028
      %v1030 = vrcp.pop %v986
      %v1031 = vmul.f32 %v986, %v1030
      %v1032 = vsub.f32 1.0, %v1031
      %v1033 = vmul.f32 %v1030, %v1032
      %v1034 = vadd.f32 %v1030, %v1033
      %vm1035 = vweird.f32 %v986
      %vm1036 = vweird.f32 %v1030
      %vm1037 = vmor %vm1035, %vm1036
      %v1038 = vsel %vm1037, %v1030, %v1034
      %v1039 = vand.u32 2147483647, %v986
      %vm1040 = vcmp.eq.f32.partialorder %v1039, 8.507059e+37
      %v1041 = vand.u32 %v986, 2147483648
      %v1042 = vor.u32 1.1754944e-38, %v1041
      %v1043 = vsel %vm1040, %v1042, %v1038
      %v1044 = vmul.f32 %v970, %v1043
      %v1045 = vrcp.pop %v987
      %v1046 = vmul.f32 %v987, %v1045
      %v1047 = vsub.f32 1.0, %v1046
      %v1048 = vmul.f32 %v1045, %v1047
      %v1049 = vadd.f32 %v1045, %v1048
      %vm1050 = vweird.f32 %v987
      %vm1051 = vweird.f32 %v1045
      %vm1052 = vmor %vm1050, %vm1051
      %v1053 = vsel %vm1052, %v1045, %v1049
      %v1054 = vand.u32 2147483647, %v987
      %vm1055 = vcmp.eq.f32.partialorder %v1054, 8.507059e+37
      %v1056 = vand.u32 %v987, 2147483648
      %v1057 = vor.u32 1.1754944e-38, %v1056
      %v1058 = vsel %vm1055, %v1057, %v1053
      %v1059 = vmul.f32 %v971, %v1058
      %v1060 = vrcp.pop %v988
      %v1061 = vmul.f32 %v988, %v1060
      %v1062 = vsub.f32 1.0, %v1061
      %v1063 = vmul.f32 %v1060, %v1062
      %v1064 = vadd.f32 %v1060, %v1063
      %vm1065 = vweird.f32 %v988
      %vm1066 = vweird.f32 %v1060
      %vm1067 = vmor %vm1065, %vm1066
      %v1068 = vsel %vm1067, %v1060, %v1064
      %v1069 = vand.u32 2147483647, %v988
      %vm1070 = vcmp.eq.f32.partialorder %v1069, 8.507059e+37
      %v1071 = vand.u32 %v988, 2147483648
      %v1072 = vor.u32 1.1754944e-38, %v1071
      %v1073 = vsel %vm1070, %v1072, %v1068
      %v1074 = vmul.f32 %v972, %v1073
      %v1075 = vrcp.pop %v989
      %v1076 = vmul.f32 %v989, %v1075
      %v1077 = vsub.f32 1.0, %v1076
      %v1078 = vmul.f32 %v1075, %v1077
      %v1079 = vadd.f32 %v1075, %v1078
      %vm1080 = vweird.f32 %v989
      %vm1081 = vweird.f32 %v1075
      %vm1082 = vmor %vm1080, %vm1081
      %v1083 = vsel %vm1082, %v1075, %v1079
      %v1084 = vand.u32 2147483647, %v989
      %vm1085 = vcmp.eq.f32.partialorder %v1084, 8.507059e+37
      %v1086 = vand.u32 %v989, 2147483648
      %v1087 = vor.u32 1.1754944e-38, %v1086
      %v1088 = vsel %vm1085, %v1087, %v1083
      %v1089 = vmul.f32 %v973, %v1088
      %v1090 = vrcp.pop %v990
      %v1091 = vmul.f32 %v990, %v1090
      %v1092 = vsub.f32 1.0, %v1091
      %v1093 = vmul.f32 %v1090, %v1092
      %v1094 = vadd.f32 %v1090, %v1093
      %vm1095 = vweird.f32 %v990
      %vm1096 = vweird.f32 %v1090
      %vm1097 = vmor %vm1095, %vm1096
      %v1098 = vsel %vm1097, %v1090, %v1094
      %v1099 = vand.u32 2147483647, %v990
      %vm1100 = vcmp.eq.f32.partialorder %v1099, 8.507059e+37
      %v1101 = vand.u32 %v990, 2147483648
      %v1102 = vor.u32 1.1754944e-38, %v1101
      %v1103 = vsel %vm1100, %v1102, %v1098
      %v1104 = vmul.f32 %v974, %v1103
      %v1105 = vrcp.pop %v991
      %v1106 = vmul.f32 %v991, %v1105
      %v1107 = vsub.f32 1.0, %v1106
      %v1108 = vmul.f32 %v1105, %v1107
      %v1109 = vadd.f32 %v1105, %v1108
      %vm1110 = vweird.f32 %v991
      %vm1111 = vweird.f32 %v1105
      %vm1112 = vmor %vm1110, %vm1111
      %v1113 = vsel %vm1112, %v1105, %v1109
      %v1114 = vand.u32 2147483647, %v991
      %vm1115 = vcmp.eq.f32.partialorder %v1114, 8.507059e+37
      %v1116 = vand.u32 %v991, 2147483648
      %v1117 = vor.u32 1.1754944e-38, %v1116
      %v1118 = vsel %vm1115, %v1117, %v1113
      %v1119 = vmul.f32 %v975, %v1118
      %v1120 = vrcp.pop %v992
      %v1121 = vmul.f32 %v992, %v1120
      %v1122 = vsub.f32 1.0, %v1121
      %v1123 = vmul.f32 %v1120, %v1122
      %v1124 = vadd.f32 %v1120, %v1123
      %vm1125 = vweird.f32 %v992
      %vm1126 = vweird.f32 %v1120
      %vm1127 = vmor %vm1125, %vm1126
      %v1128 = vsel %vm1127, %v1120, %v1124
      %v1129 = vand.u32 2147483647, %v992
      %vm1130 = vcmp.eq.f32.partialorder %v1129, 8.507059e+37
      %v1131 = vand.u32 %v992, 2147483648
      %v1132 = vor.u32 1.1754944e-38, %v1131
      %v1133 = vsel %vm1130, %v1132, %v1128
      %v1134 = vmul.f32 %v976, %v1133
      %v1135 = vrcp.pop %v993
      %v1136 = vmul.f32 %v993, %v1135
      %v1137 = vsub.f32 1.0, %v1136
      %v1138 = vmul.f32 %v1135, %v1137
      %v1139 = vadd.f32 %v1135, %v1138
      %vm1140 = vweird.f32 %v993
      %vm1141 = vweird.f32 %v1135
      %vm1142 = vmor %vm1140, %vm1141
      %v1143 = vsel %vm1142, %v1135, %v1139
      %v1144 = vand.u32 2147483647, %v993
      %vm1145 = vcmp.eq.f32.partialorder %v1144, 8.507059e+37
      %v1146 = vand.u32 %v993, 2147483648
      %v1147 = vor.u32 1.1754944e-38, %v1146
      %v1148 = vsel %vm1145, %v1147, %v1143
      %v1149 = vmul.f32 %v977, %v1148
      %v1150 = vrcp.pop %v994
      %v1151 = vmul.f32 %v994, %v1150
      %v1152 = vsub.f32 1.0, %v1151
      %v1153 = vmul.f32 %v1150, %v1152
      %v1154 = vadd.f32 %v1150, %v1153
      %vm1155 = vweird.f32 %v994
      %vm1156 = vweird.f32 %v1150
      %vm1157 = vmor %vm1155, %vm1156
      %v1158 = vsel %vm1157, %v1150, %v1154
      %v1159 = vand.u32 2147483647, %v994
      %vm1160 = vcmp.eq.f32.partialorder %v1159, 8.507059e+37
      %v1161 = vand.u32 %v994, 2147483648
      %v1162 = vor.u32 1.1754944e-38, %v1161
      %v1163 = vsel %vm1160, %v1162, %v1158
      %v1164 = vmul.f32 %v978, %v1163
      %v1165 = vrcp.pop %v995
      %v1166 = vmul.f32 %v995, %v1165
      %v1167 = vsub.f32 1.0, %v1166
      %v1168 = vmul.f32 %v1165, %v1167
      %v1169 = vadd.f32 %v1165, %v1168
      %vm1170 = vweird.f32 %v995
      %vm1171 = vweird.f32 %v1165
      %vm1172 = vmor %vm1170, %vm1171
      %v1173 = vsel %vm1172, %v1165, %v1169
      %v1174 = vand.u32 2147483647, %v995
      %vm1175 = vcmp.eq.f32.partialorder %v1174, 8.507059e+37
      %v1176 = vand.u32 %v995, 2147483648
      %v1177 = vor.u32 1.1754944e-38, %v1176
      %v1178 = vsel %vm1175, %v1177, %v1173
      %v1179 = vmul.f32 %v979, %v1178
      %v1180 = vrcp.pop %v996
      %v1181 = vmul.f32 %v996, %v1180
      %v1182 = vsub.f32 1.0, %v1181
      %v1183 = vmul.f32 %v1180, %v1182
      %v1184 = vadd.f32 %v1180, %v1183
      %vm1185 = vweird.f32 %v996
      %vm1186 = vweird.f32 %v1180
      %vm1187 = vmor %vm1185, %vm1186
      %v1188 = vsel %vm1187, %v1180, %v1184
      %v1189 = vand.u32 2147483647, %v996
      %vm1190 = vcmp.eq.f32.partialorder %v1189, 8.507059e+37
      %v1191 = vand.u32 %v996, 2147483648
      %v1192 = vor.u32 1.1754944e-38, %v1191
      %v1193 = vsel %vm1190, %v1192, %v1188
      %v1194 = vmul.f32 %v980, %v1193
      %v1195 = vrcp.pop %v997
      %v1196 = vmul.f32 %v997, %v1195
      %v1197 = vsub.f32 1.0, %v1196
      %v1198 = vmul.f32 %v1195, %v1197
      %v1199 = vadd.f32 %v1195, %v1198
      %vm1200 = vweird.f32 %v997
      %vm1201 = vweird.f32 %v1195
      %vm1202 = vmor %vm1200, %vm1201
      %v1203 = vsel %vm1202, %v1195, %v1199
      %v1204 = vand.u32 2147483647, %v997
      %vm1205 = vcmp.eq.f32.partialorder %v1204, 8.507059e+37
      %v1206 = vand.u32 %v997, 2147483648
      %v1207 = vor.u32 1.1754944e-38, %v1206
      %v1208 = vsel %vm1205, %v1207, %v1203
      %v1209 = vmul.f32 %v981, %v1208
      %v1210 = vrcp.pop %v998
      %v1211 = vmul.f32 %v998, %v1210
      %v1212 = vsub.f32 1.0, %v1211
      %v1213 = vmul.f32 %v1210, %v1212
      %v1214 = vadd.f32 %v1210, %v1213
      %vm1215 = vweird.f32 %v998
      %vm1216 = vweird.f32 %v1210
      %vm1217 = vmor %vm1215, %vm1216
      %v1218 = vsel %vm1217, %v1210, %v1214
      %v1219 = vand.u32 2147483647, %v998
      %vm1220 = vcmp.eq.f32.partialorder %v1219, 8.507059e+37
      %v1221 = vand.u32 %v998, 2147483648
      %v1222 = vor.u32 1.1754944e-38, %v1221
      %v1223 = vsel %vm1220, %v1222, %v1218
      %v1224 = vmul.f32 %v982, %v1223
      %v1225 = vrcp.pop %v999
      %v1226 = vmul.f32 %v999, %v1225
      %v1227 = vsub.f32 1.0, %v1226
      %v1228 = vmul.f32 %v1225, %v1227
      %v1229 = vadd.f32 %v1225, %v1228
      %vm1230 = vweird.f32 %v999
      %vm1231 = vweird.f32 %v1225
      %vm1232 = vmor %vm1230, %vm1231
      %v1233 = vsel %vm1232, %v1225, %v1229
      %v1234 = vand.u32 2147483647, %v999
      %vm1235 = vcmp.eq.f32.partialorder %v1234, 8.507059e+37
      %v1236 = vand.u32 %v999, 2147483648
      %v1237 = vor.u32 1.1754944e-38, %v1236
      %v1238 = vsel %vm1235, %v1237, %v1233
      %v1239 = vmul.f32 %v983, %v1238
      %v1240 = vld [vmem:[#allocation2] sm:$0xff]
      %v1241 = vld [vmem:[#allocation2 + $0x8] sm:$0xff]
      %v1242 = vld [vmem:[#allocation2 + $0x10] sm:$0xff]
      %v1243 = vld [vmem:[#allocation2 + $0x18] sm:$0xff]
      %v1244 = vld [vmem:[#allocation2 + $0x20] sm:$0xff]
      %v1245 = vld [vmem:[#allocation2 + $0x28] sm:$0xff]
      %v1246 = vld [vmem:[#allocation2 + $0x30] sm:$0xff]
      %v1247 = vld [vmem:[#allocation2 + $0x38] sm:$0xff]
      %v1248 = vld [vmem:[#allocation2 + $0x40] sm:$0xff]
      %v1249 = vld [vmem:[#allocation2 + $0x48] sm:$0xff]
      %v1250 = vld [vmem:[#allocation2 + $0x50] sm:$0xff]
      %v1251 = vld [vmem:[#allocation2 + $0x58] sm:$0xff]
      %v1252 = vld [vmem:[#allocation2 + $0x60] sm:$0xff]
      %v1253 = vld [vmem:[#allocation2 + $0x68] sm:$0xff]
      %v1254 = vld [vmem:[#allocation2 + $0x70] sm:$0xff]
      %v1255 = vld [vmem:[#allocation2 + $0x78] sm:$0xff]
      %v1256 = vld [vmem:[#allocation3] sm:$0xff]
      %v1257 = vld [vmem:[#allocation3 + $0x8] sm:$0xff]
      %v1258 = vld [vmem:[#allocation3 + $0x10] sm:$0xff]
      %v1259 = vld [vmem:[#allocation3 + $0x18] sm:$0xff]
      %v1260 = vld [vmem:[#allocation3 + $0x20] sm:$0xff]
      %v1261 = vld [vmem:[#allocation3 + $0x28] sm:$0xff]
      %v1262 = vld [vmem:[#allocation3 + $0x30] sm:$0xff]
      %v1263 = vld [vmem:[#allocation3 + $0x38] sm:$0xff]
      %v1264 = vld [vmem:[#allocation3 + $0x40] sm:$0xff]
      %v1265 = vld [vmem:[#allocation3 + $0x48] sm:$0xff]
      %v1266 = vld [vmem:[#allocation3 + $0x50] sm:$0xff]
      %v1267 = vld [vmem:[#allocation3 + $0x58] sm:$0xff]
      %v1268 = vld [vmem:[#allocation3 + $0x60] sm:$0xff]
      %v1269 = vld [vmem:[#allocation3 + $0x68] sm:$0xff]
      %v1270 = vld [vmem:[#allocation3 + $0x70] sm:$0xff]
      %v1271 = vld [vmem:[#allocation3 + $0x78] sm:$0xff]
      %v1272 = vlog2.pop %v1256
      %v1273 = vmul.f32 %v1272, 0.6931472
      %v1274 = vlog2.pop %v1257
      %v1275 = vmul.f32 %v1274, 0.6931472
      %v1276 = vlog2.pop %v1258
      %v1277 = vmul.f32 %v1276, 0.6931472
      %v1278 = vlog2.pop %v1259
      %v1279 = vmul.f32 %v1278, 0.6931472
      %v1280 = vlog2.pop %v1260
      %v1281 = vmul.f32 %v1280, 0.6931472
      %v1282 = vlog2.pop %v1261
      %v1283 = vmul.f32 %v1282, 0.6931472
      %v1284 = vlog2.pop %v1262
      %v1285 = vmul.f32 %v1284, 0.6931472
      %v1286 = vlog2.pop %v1263
      %v1287 = vmul.f32 %v1286, 0.6931472
      %v1288 = vlog2.pop %v1264
      %v1289 = vmul.f32 %v1288, 0.6931472
      %v1290 = vlog2.pop %v1265
      %v1291 = vmul.f32 %v1290, 0.6931472
      %v1292 = vlog2.pop %v1266
      %v1293 = vmul.f32 %v1292, 0.6931472
      %v1294 = vlog2.pop %v1267
      %v1295 = vmul.f32 %v1294, 0.6931472
      %v1296 = vlog2.pop %v1268
      %v1297 = vmul.f32 %v1296, 0.6931472
      %v1298 = vlog2.pop %v1269
      %v1299 = vmul.f32 %v1298, 0.6931472
      %v1300 = vlog2.pop %v1270
      %v1301 = vmul.f32 %v1300, 0.6931472
      %v1302 = vlog2.pop %v1271
      %v1303 = vmul.f32 %v1302, 0.6931472
      %v1304 = vadd.f32 %v1240, %v1273
      %v1305 = vadd.f32 %v1241, %v1275
      %v1306 = vadd.f32 %v1242, %v1277
      %v1307 = vadd.f32 %v1243, %v1279
      %v1308 = vadd.f32 %v1244, %v1281
      %v1309 = vadd.f32 %v1245, %v1283
      %v1310 = vadd.f32 %v1246, %v1285
      %v1311 = vadd.f32 %v1247, %v1287
      %v1312 = vadd.f32 %v1248, %v1289
      %v1313 = vadd.f32 %v1249, %v1291
      %v1314 = vadd.f32 %v1250, %v1293
      %v1315 = vadd.f32 %v1251, %v1295
      %v1316 = vadd.f32 %v1252, %v1297
      %v1317 = vadd.f32 %v1253, %v1299
      %v1318 = vadd.f32 %v1254, %v1301
      %v1319 = vadd.f32 %v1255, %v1303
      %v1320 = vsub.f32 %v1014, %v1304
      %v1321 = vsub.f32 %v1029, %v1305
      %v1322 = vsub.f32 %v1044, %v1306
      %v1323 = vsub.f32 %v1059, %v1307
      %v1324 = vsub.f32 %v1074, %v1308
      %v1325 = vsub.f32 %v1089, %v1309
      %v1326 = vsub.f32 %v1104, %v1310
      %v1327 = vsub.f32 %v1119, %v1311
      %v1328 = vsub.f32 %v1134, %v1312
      %v1329 = vsub.f32 %v1149, %v1313
      %v1330 = vsub.f32 %v1164, %v1314
      %v1331 = vsub.f32 %v1179, %v1315
      %v1332 = vsub.f32 %v1194, %v1316
      %v1333 = vsub.f32 %v1209, %v1317
      %v1334 = vsub.f32 %v1224, %v1318
      %v1335 = vsub.f32 %v1239, %v1319
      %v1336 = vmul.f32 %v1320, -1.0
      %v1337 = vmul.f32 %v1321, -1.0
      %v1338 = vmul.f32 %v1322, -1.0
      %v1339 = vmul.f32 %v1323, -1.0
      %v1340 = vmul.f32 %v1324, -1.0
      %v1341 = vmul.f32 %v1325, -1.0
      %v1342 = vmul.f32 %v1326, -1.0
      %v1343 = vmul.f32 %v1327, -1.0
      %v1344 = vmul.f32 %v1328, -1.0
      %v1345 = vmul.f32 %v1329, -1.0
      %v1346 = vmul.f32 %v1330, -1.0
      %v1347 = vmul.f32 %v1331, -1.0
      %v1348 = vmul.f32 %v1332, -1.0
      %v1349 = vmul.f32 %v1333, -1.0
      %v1350 = vmul.f32 %v1334, -1.0
      %v1351 = vmul.f32 %v1335, -1.0
      %1352 = vst.msk [vmem:[%s4] sm:$0xff] %vm756, %v1336
      %1353 = vst.msk [vmem:[%s4 + $0x8] sm:$0xff] %vm756, %v1337
      %1354 = vst.msk [vmem:[%s4 + $0x10] sm:$0xff] %vm756, %v1338
      %1355 = vst.msk [vmem:[%s4 + $0x18] sm:$0xff] %vm756, %v1339
      %1356 = vst.msk [vmem:[%s4 + $0x20] sm:$0xff] %vm756, %v1340
      %1357 = vst.msk [vmem:[%s4 + $0x28] sm:$0xff] %vm756, %v1341
      %1358 = vst.msk [vmem:[%s4 + $0x30] sm:$0xff] %vm756, %v1342
      %1359 = vst.msk [vmem:[%s4 + $0x38] sm:$0xff] %vm756, %v1343
      %1360 = vst.msk [vmem:[%s4 + $0x40] sm:$0xff] %vm756, %v1344
      %1361 = vst.msk [vmem:[%s4 + $0x48] sm:$0xff] %vm756, %v1345
      %1362 = vst.msk [vmem:[%s4 + $0x50] sm:$0xff] %vm756, %v1346
      %1363 = vst.msk [vmem:[%s4 + $0x58] sm:$0xff] %vm756, %v1347
      %1364 = vst.msk [vmem:[%s4 + $0x60] sm:$0xff] %vm756, %v1348
      %1365 = vst.msk [vmem:[%s4 + $0x68] sm:$0xff] %vm756, %v1349
      %1366 = vst.msk [vmem:[%s4 + $0x70] sm:$0xff] %vm756, %v1350
      %1367 = vst.msk [vmem:[%s4 + $0x78] sm:$0xff] %vm756, %v1351
    $region29: #{tpu_custom_call.1} parent=1 // pred_fallthru
      _
    // Predicated region
    $region30: #{tpu_custom_call.1} parent=1 // pred_check
      _
    $region31: #{tpu_custom_call.1} parent=1 // pred_check_branch
      %1369 = sbr.rel (0) target = $region33
    $region32: #{tpu_custom_call.1} parent=1 // pred_region
      _
    $region33: #{tpu_custom_call.1} parent=1 // pred_fallthru
      _
    // Predicated region
    $region34: #{tpu_custom_call.1} parent=1 // pred_check
      _
    $region35: #{tpu_custom_call.1} parent=1 // pred_check_branch
      %1371 = sbr.rel (0) target = $region37
    $region36: #{tpu_custom_call.1} parent=1 // pred_region
      _
    $region37: #{tpu_custom_call.1} parent=1 // pred_fallthru
      _
    %1372 = vsyncpa [#allocation7], 1

</llo_original>
